<compile_context>
chip_gen: v7x
topology: tpu7x:2x2x1
jax: 0.10.0
libtpu: 0.0.40
codegen_flags: <defaults>
</compile_context>

<pallas_src>
from functools import lru_cache

import numpy as np
import jax
import jax.numpy as jnp
from jax.experimental import pallas as pl
from jax.experimental.pallas import tpu as pltpu

BN_EPS = 1e-5
NEG_BIG = -3.0e38   # -inf sentinel for max-pool padding

PRIMITIVES = [
    'none',
    'max_pool_3x3',
    'avg_pool_3x3',
    'skip_connect',
    'sep_conv_3x3',
    'sep_conv_5x5',
    'dil_conv_3x3',
    'dil_conv_5x5',
]

VMEM_SPEC = pl.BlockSpec(memory_space=pltpu.MemorySpace.VMEM)
SMEM_SPEC = pl.BlockSpec(memory_space=pltpu.MemorySpace.SMEM)
COMPILER_PARAMS = pltpu.CompilerParams(vmem_limit_bytes=32 * 1024 * 1024)


# ----------------------------------------------------------------------------
# Shared in-kernel BatchNorm (training mode, affine=False) on the folded
# (rows, W*C) layout.  Row sums and the per-channel grouping / broadcast all
# run on the MXU (ones-row matmul, G / G^T matmuls).
# ----------------------------------------------------------------------------

def _bn2d(y, ones_row, g, gt, inv_cnt):
    f32 = jnp.float32
    s = jnp.dot(ones_row, y, preferred_element_type=f32)          # (1, W*C)
    s2 = jnp.dot(ones_row, y * y, preferred_element_type=f32)     # (1, W*C)
    mc = jnp.dot(s, g, preferred_element_type=f32) * inv_cnt      # (1, C)
    m2c = jnp.dot(s2, g, preferred_element_type=f32) * inv_cnt    # (1, C)
    var = jnp.maximum(m2c - mc * mc, 0.0)                         # one-pass var
    rstd = jax.lax.rsqrt(var + BN_EPS)
    mu = jnp.dot(mc, gt, preferred_element_type=f32)              # back to W*C
    rs = jnp.dot(rstd, gt, preferred_element_type=f32)
    return (y - mu) * rs


# ----------------------------------------------------------------------------
# Wrapper-side weight / selection-matrix packing (pure layout plumbing)
# ----------------------------------------------------------------------------

def _sel_even(w_in, w_out):
    s = np.zeros((w_in, w_out), np.float32)
    s[2 * np.arange(w_out), np.arange(w_out)] = 1.0
    return jnp.asarray(s)


def _sel_odd(w_in, w_out):
    s = np.zeros((w_in, w_out), np.float32)
    s[2 * np.arange(w_out) + 1, np.arange(w_out)] = 1.0
    return jnp.asarray(s)


def _eye(n):
    return jnp.asarray(np.eye(n, dtype=np.float32))


def _group_mats(w_groups, c):
    """G[(w*C+c), c'] = (c==c')  and its transpose, for BN channel grouping."""
    g = np.kron(np.ones((w_groups, 1), np.float32), np.eye(c, dtype=np.float32))
    return jnp.asarray(g), jnp.asarray(g.T)


def _blockdiag(sel, w):
    """Block matrix M[wi*Cin+ci, wo*Cout+co] = sel[wi, wo] * w[ci, co]."""
    return jnp.kron(sel, w.astype(jnp.float32))


def _tile_dw(dw, w_groups):
    """(K*K, C) depthwise weights -> (K*K, 1, W*C), pre-tiled along lanes."""
    kk = dw.shape[0]
    return jnp.tile(dw.astype(jnp.float32), (1, w_groups)).reshape(kk, 1, -1)


# ----------------------------------------------------------------------------
# Fused preprocess: s0 (ReLUConvBN or FactorizedReduce) + s1 (ReLUConvBN)
# in ONE pallas_call, folded lane-dense layout, MXU matmuls + MXU BN.
# ----------------------------------------------------------------------------

@lru_cache(maxsize=None)
def _preprocess_call(N, H, W, C, reduction_prev):
    NH, WC = N * H, W * C
    inv_cnt = 1.0 / float(N * H * W)

    def kernel(*refs):
        f32 = jnp.float32
        if reduction_prev:
            x0e, x0o, w1, w2, x1, wp1, g_ref, gt_ref, s0_ref, s1_ref = refs
        else:
            x0, w0, x1, wp1, g_ref, gt_ref, s0_ref, s1_ref = refs
        ones_row = jnp.ones((1, NH), f32)
        g = g_ref[...]
        gt = gt_ref[...]
        if reduction_prev:   # FactorizedReduce: relu -> 2 strided 1x1 -> concat -> BN
            y0 = (jnp.dot(jnp.maximum(x0e[...], 0.0), w1[...],
                          preferred_element_type=f32) +
                  jnp.dot(jnp.maximum(x0o[...], 0.0), w2[...],
                          preferred_element_type=f32))
        else:                # ReLUConvBN 1x1
            y0 = jnp.dot(jnp.maximum(x0[...], 0.0), w0[...],
                         preferred_element_type=f32)
        s0_ref[...] = _bn2d(y0, ones_row, g, gt, inv_cnt)
        y1 = jnp.dot(jnp.maximum(x1[...], 0.0), wp1[...],
                     preferred_element_type=f32)
        s1_ref[...] = _bn2d(y1, ones_row, g, gt, inv_cnt)

    n_in = 8 if reduction_prev else 6
    return jax.jit(pl.pallas_call(
        kernel,
        out_shape=(jax.ShapeDtypeStruct((NH, WC), jnp.float32),
                   jax.ShapeDtypeStruct((NH, WC), jnp.float32)),
        in_specs=[VMEM_SPEC] * n_in,
        out_specs=(VMEM_SPEC, VMEM_SPEC),
        compiler_params=COMPILER_PARAMS,
    ))


def preprocess_fused(s0_nhwc, s1_nhwc, params, C, reduction_prev):
    N, H, W, C_prev = s1_nhwc.shape
    g, gt = _group_mats(W, C)
    x1_2d = s1_nhwc.reshape(N * H, W * C_prev)
    wp1 = _blockdiag(_eye(W), params['pre1']['w'])
    call = _preprocess_call(N, H, W, C, reduction_prev)
    if reduction_prev:
        _, H0, W0, C_pp = s0_nhwc.shape
        x0 = s0_nhwc.reshape(N, H0, W0 * C_pp)
        x0e = x0[:, ::2, :].reshape(N * H, W0 * C_pp)
        x0o = x0[:, 1::2, :].reshape(N * H, W0 * C_pp)
        half = C // 2
        w1p = jnp.concatenate(
            [params['pre0']['w1'], jnp.zeros((C_pp, C - half), jnp.float32)], axis=1)
        w2p = jnp.concatenate(
            [jnp.zeros((C_pp, half), jnp.float32), params['pre0']['w2']], axis=1)
        w1blk = _blockdiag(_sel_even(W0, W), w1p)
        w2blk = _blockdiag(_sel_odd(W0, W), w2p)
        s0f, s1f = call(x0e, x0o, w1blk, w2blk, x1_2d, wp1, g, gt)
    else:
        C_pp = s0_nhwc.shape[-1]
        x0_2d = s0_nhwc.reshape(N * H, W * C_pp)
        w0blk = _blockdiag(_eye(W), params['pre0']['w'])
        s0f, s1f = call(x0_2d, w0blk, x1_2d, wp1, g, gt)
    return s0f.reshape(N, H, W * C), s1f.reshape(N, H, W * C)


# ----------------------------------------------------------------------------
# Fused per-edge MixedOp kernel (folded lane-dense layout):
#     out = (acc +) sum_k  w[k] * PRIMITIVE_k(x)
# ----------------------------------------------------------------------------

@lru_cache(maxsize=None)
def _edge_call(active, stride, N, H, W, C, has_acc):
    Ho, Wo = H // stride, W // stride
    WC, WoC = W * C, Wo * C
    NHo = N * Ho
    inv_cnt = 1.0 / float(N * Ho * Wo)

    def _k(p):
        return 3 if p.endswith('3x3') else 5

    def _pad(p):
        if p.startswith('sep_conv'):
            return _k(p) // 2
        if p.startswith('dil_conv'):
            return 2 * (_k(p) // 2)
        return 0

    def _nparam(p):
        if p.startswith('sep_conv'):
            return 4
        if p.startswith('dil_conv'):
            return 2
        if p == 'skip_connect' and stride == 2:
            return 2
        return 0

    counts = tuple(_nparam(p) for p in active)
    n_par = sum(counts)
    conv_prims = [p for p in active if p.startswith(('sep_conv', 'dil_conv'))]
    Pc = max((_pad(p) for p in conv_prims), default=0)
    Ps = max((_k(p) // 2 for p in active if p.startswith('sep_conv')), default=0)
    has_pool = any('pool' in p for p in active)
    need_wsub = has_pool and stride == 2

    scratch_shapes = []

    def _alloc(shape):
        scratch_shapes.append(pltpu.VMEM(shape, jnp.float32))
        return len(scratch_shapes) - 1

    cpad_i = _alloc((N, H + 2 * Pc, (W + 2 * Pc) * C)) if Pc else None
    ppad_i = _alloc((N, H + 2, (W + 2) * C)) if has_pool else None
    spad_i = _alloc((N, Ho + 2 * Ps, (Wo + 2 * Ps) * C)) if Ps else None

    n_fixed = 3 + (1 if need_wsub else 0)                # x, G, G^T, [wsub]
    n_in = n_fixed + n_par + 1 + (1 if has_acc else 0)   # + wmix, [acc]

    def kernel(*refs):
        f32 = jnp.float32
        x_ref, g_ref, gt_ref = refs[0], refs[1], refs[2]
        wsub_ref = refs[3] if need_wsub else None
        par = refs[n_fixed:n_fixed + n_par]
        wmix = refs[n_fixed + n_par]                     # (n_active,) f32 in SMEM
        acc_ref = refs[n_fixed + n_par + 1] if has_acc else None
        out_ref = refs[n_in]
        scratch = refs[n_in + 1:]

        x = x_ref[...]                                   # (N, H, W*C)
        g = g_ref[...]
        gt = gt_ref[...]
        ones_row = jnp.ones((1, NHo), f32)               # hoisted: BN row sums (MXU)

        # ---- scratch fills: interior once, thin halo strips only -----------
        if cpad_i is not None:
            cp = scratch[cpad_i]
            WCp = (W + 2 * Pc) * C
            cp[:, Pc:Pc + H, Pc * C:(Pc + W) * C] = jnp.maximum(x, 0.0)  # ReLU once
            cp[:, 0:Pc, :] = jnp.zeros((N, Pc, WCp), f32)
            cp[:, Pc + H:H + 2 * Pc, :] = jnp.zeros((N, Pc, WCp), f32)
            cp[:, Pc:Pc + H, 0:Pc * C] = jnp.zeros((N, H, Pc * C), f32)
            cp[:, Pc:Pc + H, (Pc + W) * C:WCp] = jnp.zeros((N, H, Pc * C), f32)
        if ppad_i is not None:
            pp = scratch[ppad_i]
            pp[:, 1:1 + H, C:(1 + W) * C] = x            # raw x; halo set per pool
        if spad_i is not None:
            sp = scratch[spad_i]
            WSp = (Wo + 2 * Ps) * C
            sp[:, 0:Ps, :] = jnp.zeros((N, Ps, WSp), f32)
            sp[:, Ps + Ho:Ho + 2 * Ps, :] = jnp.zeros((N, Ps, WSp), f32)
            sp[:, Ps:Ps + Ho, 0:Ps * C] = jnp.zeros((N, Ho, Ps * C), f32)
            sp[:, Ps:Ps + Ho, (Ps + Wo) * C:WSp] = jnp.zeros((N, Ho, Ps * C), f32)

        def bn(y):                                       # (NHo, WoC) -> (NHo, WoC)
            return _bn2d(y, ones_row, g, gt, inv_cnt)

        def rows_sub(y3):                                # H subsample (stride 2)
            return y3 if stride == 1 else y3[:, ::2, :]

        def to2d(y3):
            return y3.reshape(NHo, y3.shape[-1])

        def wsub2d(y2):                                  # W subsample via matmul
            if stride == 1:
                return y2
            return jnp.dot(y2, wsub_ref[...], preferred_element_type=f32)

        def dconv(src, hsz, wsz, K, dil, pad, PAD, wt_ref):
            # depthwise KxK on a (PAD)-padded folded scratch; one row-slab load
            # per kh, lane-direction (multiples of C) slices per kw; tap weights
            # are pre-tiled to wsz*C lanes by the wrapper.
            r0 = PAD - pad
            l0 = (PAD - pad) * C
            acc = None
            for kh in range(K):
                slab = src[:, r0 + kh * dil:r0 + kh * dil + hsz, :]
                for kw in range(K):
                    l = l0 + kw * dil * C
                    t = slab[:, :, l:l + wsz * C] * wt_ref[kh * K + kw]
                    acc = t if acc is None else acc + t
            return acc

        def set_pool_halo(val):
            WPp = (W + 2) * C
            pp[:, 0:1, :] = jnp.full((N, 1, WPp), val, f32)
            pp[:, 1 + H:2 + H, :] = jnp.full((N, 1, WPp), val, f32)
            pp[:, 1:1 + H, 0:C] = jnp.full((N, H, C), val, f32)
            pp[:, 1:1 + H, (1 + W) * C:WPp] = jnp.full((N, H, C), val, f32)

        total = acc_ref[...] if has_acc else None
        pi = 0
        for k, prim in enumerate(active):
            prm = par[pi:pi + counts[k]]
            pi += counts[k]
            wk = wmix[k]

            if prim == 'max_pool_3x3':                   # pool + BN (MixedOp adds BN)
                set_pool_halo(NEG_BIG)                   # pad taps behave like -inf
                m = None
                for kh in range(3):
                    slab = pp[:, kh:kh + H, :]
                    for kw in range(3):
                        t = slab[:, :, kw * C:kw * C + WC]
                        m = t if m is None else jnp.maximum(m, t)
                y = bn(wsub2d(to2d(rows_sub(m))))
            elif prim == 'avg_pool_3x3':                 # count_include_pad=False
                set_pool_halo(0.0)
                s = None
                for kh in range(3):
                    slab = pp[:, kh:kh + H, :]
                    for kw in range(3):
                        t = slab[:, :, kw * C:kw * C + WC]
                        s = t if s is None else s + t
                hh = jax.lax.broadcasted_iota(jnp.int32, (1, H, 1), 1)
                wg = jax.lax.broadcasted_iota(jnp.int32, (1, 1, WC), 2) // C
                ch = (jnp.where((hh == 0) | (hh == H - 1), 2.0, 3.0)
                      if H > 1 else jnp.ones((1, H, 1), f32))
                cw = (jnp.where((wg == 0) | (wg == W - 1), 2.0, 3.0)
                      if W > 1 else jnp.ones((1, 1, WC), f32))
                s = s * pl.reciprocal(ch * cw, approx=True)   # EUP slot
                y = bn(wsub2d(to2d(rows_sub(s))))
            elif prim == 'skip_connect' and stride == 1:
                y = to2d(x)
            elif prim == 'skip_connect':                 # FactorizedReduce (stride 2)
                w1blk, w2blk = prm
                xr = jnp.maximum(x, 0.0)
                y = (jnp.dot(to2d(xr[:, ::2, :]), w1blk[...],
                             preferred_element_type=f32) +
                     jnp.dot(to2d(xr[:, 1::2, :]), w2blk[...],
                             preferred_element_type=f32))
                y = bn(y)
            elif prim.startswith('sep_conv'):
                K = _k(prim)
                pad = K // 2
                dw1, pw1, dw2, pw2 = prm
                y3 = dconv(cp, H, W, K, 1, pad, Pc, dw1)
                y = jnp.dot(to2d(rows_sub(y3)), pw1[...],
                            preferred_element_type=f32)  # 1x1 (+W-subsample) on MXU
                y = bn(y)
                sp[:, Ps:Ps + Ho, Ps * C:(Ps + Wo) * C] = (
                    jnp.maximum(y, 0.0).reshape(N, Ho, WoC))
                y3 = dconv(sp, Ho, Wo, K, 1, pad, Ps, dw2)
                y = bn(jnp.dot(to2d(y3), pw2[...], preferred_element_type=f32))
            elif prim.startswith('dil_conv'):
                K = _k(prim)
                pad = 2 * (K // 2)
                dwt, pwblk = prm
                y3 = dconv(cp, H, W, K, 2, pad, Pc, dwt)
                y = bn(jnp.dot(to2d(rows_sub(y3)), pwblk[...],
                               preferred_element_type=f32))
            else:
                raise ValueError(prim)

            contrib = wk * y                             # mixing weight in-kernel
            total = contrib if total is None else total + contrib

        out_ref[...] = total

    in_specs = ([VMEM_SPEC] * (n_fixed + n_par) + [SMEM_SPEC] +
                ([VMEM_SPEC] if has_acc else []))
    aliases = {n_in - 1: 0} if has_acc else {}
    call = pl.pallas_call(
        kernel,
        out_shape=jax.ShapeDtypeStruct((NHo, WoC), jnp.float32),
        in_specs=in_specs,
        out_specs=VMEM_SPEC,
        scratch_shapes=tuple(scratch_shapes),
        input_output_aliases=aliases,                    # accumulate in place
        compiler_params=COMPILER_PARAMS,
    )
    donate = (n_in - 1,) if has_acc else ()
    return jax.jit(call, donate_argnums=donate)


def _prep_edge_params(prim, stride, p, w_in, C):
    """Pack logical per-primitive params into the kernel-ready folded layout."""
    w_out = w_in // stride
    s1 = _eye(w_in) if stride == 1 else _sel_even(w_in, w_out)
    if prim.startswith('sep_conv'):
        return [_tile_dw(p['dw1'], w_in), _blockdiag(s1, p['pw1']),
                _tile_dw(p['dw2'], w_out), _blockdiag(_eye(w_out), p['pw2'])]
    if prim.startswith('dil_conv'):
        return [_tile_dw(p['dw'], w_in), _blockdiag(s1, p['pw'])]
    if prim == 'skip_connect' and stride == 2:
        half = C // 2
        w1p = jnp.concatenate(
            [p['fr_w1'], jnp.zeros((C, C - half), jnp.float32)], axis=1)
        w2p = jnp.concatenate(
            [jnp.zeros((C, half), jnp.float32), p['fr_w2']], axis=1)
        return [_blockdiag(_sel_even(w_in, w_out), w1p),
                _blockdiag(_sel_odd(w_in, w_out), w2p)]
    return []


def mixed_op_edge(h, C, active, stride, edge_params, wvec, acc):
    """Fused MixedOp for one edge; accumulates onto `acc` (aliased) if given."""
    N, Hh, WhC = h.shape
    Wh = WhC // C
    Ho, Wo = Hh // stride, Wh // stride
    g, gt = _group_mats(Wo, C)
    need_wsub = stride == 2 and any('pool' in p for p in active)
    args = [h, g, gt]
    if need_wsub:
        args.append(_blockdiag(_sel_even(Wh, Wo), _eye(C)))
    for p in active:
        args.extend(_prep_edge_params(p, stride, edge_params[p], Wh, C))
    args.append(jnp.asarray(wvec, jnp.float32))
    has_acc = acc is not None
    if has_acc:
        args.append(acc)
    call = _edge_call(tuple(active), stride, N, Hh, Wh, C, has_acc)
    return call(*args)


# ----------------------------------------------------------------------------
# Parameter init (deterministic, matches PyTorch layer shapes logically)
# ----------------------------------------------------------------------------

class _KeyGen:
    def __init__(self, key):
        self.key, self.i = key, 0

    def __call__(self):
        self.i += 1
        return jax.random.fold_in(self.key, self.i)


def _normal(key, shape):
    return 0.1 * jax.random.normal(key, shape, jnp.float32)


def init_cell_params(key, steps, C_pp, C_prev, C, reduction, reduction_prev):
    kg = _KeyGen(key)
    params = {}
    if reduction_prev:
        params['pre0'] = {'w1': _normal(kg(), (C_pp, C // 2)),
                          'w2': _normal(kg(), (C_pp, C // 2))}
    else:
        params['pre0'] = {'w': _normal(kg(), (C_pp, C))}
    params['pre1'] = {'w': _normal(kg(), (C_prev, C))}
    edges = []
    for i in range(steps):
        for j in range(2 + i):
            stride = 2 if reduction and j < 2 else 1
            edge = {}
            for prim in PRIMITIVES:
                if prim == 'skip_connect' and stride != 1:
                    edge[prim] = {'fr_w1': _normal(kg(), (C, C // 2)),
                                  'fr_w2': _normal(kg(), (C, C // 2))}
                elif prim.startswith('sep_conv'):
                    K = 3 if prim.endswith('3x3') else 5
                    edge[prim] = {'dw1': _normal(kg(), (K * K, C)),
                                  'pw1': _normal(kg(), (C, C)),
                                  'dw2': _normal(kg(), (K * K, C)),
                                  'pw2': _normal(kg(), (C, C))}
                elif prim.startswith('dil_conv'):
                    K = 3 if prim.endswith('3x3') else 5
                    edge[prim] = {'dw': _normal(kg(), (K * K, C)),
                                  'pw': _normal(kg(), (C, C))}
                else:
                    edge[prim] = {}
            edges.append(edge)
    params['edges'] = edges
    return params


# ----------------------------------------------------------------------------
# Cell forward (mirrors the PyTorch control flow; `weights` is concrete numpy,
# driving the same data-dependent skip logic as MixedOp.forward)
# ----------------------------------------------------------------------------

def cell_forward(s0_nchw, s1_nchw, weights, params, steps, multiplier,
                 reduction, reduction_prev):
    # TODO(synk): NCHW<->NHWC transposes kept at the cell boundary; a full-model
    # port would stay lane-dense end-to-end.
    s0 = jnp.transpose(s0_nchw, (0, 2, 3, 1)).astype(jnp.float32)
    s1 = jnp.transpose(s1_nchw, (0, 2, 3, 1)).astype(jnp.float32)
    C = params['pre1']['w'].shape[1]
    N, H, W, _ = s1.shape

    s0f, s1f = preprocess_fused(s0, s1, params, C, reduction_prev)  # (N,H,W*C)

    Hs = H // 2 if reduction else H
    Ws = W // 2 if reduction else W

    states = [s0f, s1f]
    offset = 0
    for _ in range(steps):
        step_sum = None                               # (N*Hs, Ws*C) accumulator
        for j, h in enumerate(states):
            e = offset + j
            w_edge = np.asarray(weights[e], np.float32)
            if float(w_edge.sum()) == 0.0:            # MixedOp returns 0 -> skipped
                continue
            stride = 2 if reduction and j < 2 else 1
            active = tuple(p for k, p in enumerate(PRIMITIVES)
                           if p != 'none' and float(w_edge[k]) != 0.0)
            if not active:                            # only 'none' carries weight
                if step_sum is None:
                    step_sum = jnp.zeros((N * Hs, Ws * C), jnp.float32)
                continue
            wvec = np.array([w_edge[PRIMITIVES.index(p)] for p in active],
                            np.float32)
            step_sum = mixed_op_edge(h, C, active, stride, params['edges'][e],
                                     wvec, step_sum)
        if step_sum is None:                          # every edge skipped
            step_sum = jnp.zeros((N * Hs, Ws * C), jnp.float32)
        offset += len(states)
        states.append(step_sum.reshape(N, Hs, Ws * C))

    # unfold, concat over channels (== torch.cat(dim=1)), back to NCHW
    outs = [st.reshape(N, Hs, Ws, C) for st in states[-multiplier:]]
    out = jnp.concatenate(outs, axis=-1)
    return jnp.transpose(out, (0, 3, 1, 2))


# ----------------------------------------------------------------------------
# Demo
# ----------------------------------------------------------------------------

if __name__ == "__main__":
    key = jax.random.PRNGKey(0)
    k0, k1, k2, kp = jax.random.split(key, 4)

    steps, multiplier = 2, 2
    C_pp, C_prev, C = 8, 8, 8
    reduction, reduction_prev = False, True      # exercises FactorizedReduce
    N, H, W = 2, 8, 8

    # s0 comes from two cells back (previous cell was a reduction => 2x spatial)
    s0 = jax.random.normal(k0, (N, C_pp, 2 * H, 2 * W), jnp.float32)
    s1 = jax.random.normal(k1, (N, C_prev, H, W), jnp.float32)

    num_edges = sum(2 + i for i in range(steps))           # 5 for steps=2
    w_full = jax.nn.softmax(
        jax.random.normal(k2, (num_edges, len(PRIMITIVES)), jnp.float32), axis=-1)
    # sparse architecture weights: MixedOp skips the zero entries
    active = [
        ('none', 'max_pool_3x3', 'sep_conv_3x3'),
        ('avg_pool_3x3', 'sep_conv_5x5'),
        ('skip_connect', 'dil_conv_3x3'),
        ('max_pool_3x3', 'dil_conv_5x5'),
        ('skip_connect', 'avg_pool_3x3', 'sep_conv_3x3'),
    ]
    mask = np.zeros((num_edges, len(PRIMITIVES)), np.float32)
    for e, prims in enumerate(active):
        for p in prims:
            mask[e, PRIMITIVES.index(p)] = 1.0
    weights = np.asarray(w_full) * mask

    params = init_cell_params(kp, steps, C_pp, C_prev, C, reduction, reduction_prev)

    out = cell_forward(s0, s1, weights, params, steps, multiplier,
                       reduction, reduction_prev)
    out = jax.block_until_ready(out)

    assert out.shape == (N, multiplier * C, H, W), out.shape
    assert bool(jnp.all(jnp.isfinite(out)))
    print("KERNEL_OK")
</pallas_src>

<mosaic_0001>
module attributes {stable_mosaic.version = 11 : i64} {
  func.func @kernel(%arg0: memref<16x128xf32, #tpu.memory_space<vmem>>, %arg1: memref<16x128xf32, #tpu.memory_space<vmem>>, %arg2: memref<128x64xf32, #tpu.memory_space<vmem>>, %arg3: memref<128x64xf32, #tpu.memory_space<vmem>>, %arg4: memref<16x64xf32, #tpu.memory_space<vmem>>, %arg5: memref<64x64xf32, #tpu.memory_space<vmem>>, %arg6: memref<64x8xf32, #tpu.memory_space<vmem>>, %arg7: memref<8x64xf32, #tpu.memory_space<vmem>>, %arg8: memref<16x64xf32, #tpu.memory_space<vmem>>, %arg9: memref<16x64xf32, #tpu.memory_space<vmem>>) attributes {dimension_semantics = [], scalar_prefetch = 0 : i64, scratch_operands = 0 : i64, tpu.core_type = #tpu.core_type<tc>} {
    %cst = arith.constant 1.000000e+00 : f32
    %0 = vector.broadcast %cst : f32 to vector<1x16xf32>
    %c0 = arith.constant 0 : index
    %c0_0 = arith.constant 0 : index
    %1 = vector.load %arg6[%c0, %c0_0] : memref<64x8xf32, #tpu.memory_space<vmem>>, vector<64x8xf32>
    %c0_1 = arith.constant 0 : index
    %c0_2 = arith.constant 0 : index
    %2 = vector.load %arg7[%c0_1, %c0_2] : memref<8x64xf32, #tpu.memory_space<vmem>>, vector<8x64xf32>
    %c0_3 = arith.constant 0 : index
    %c0_4 = arith.constant 0 : index
    %3 = vector.load %arg0[%c0_3, %c0_4] : memref<16x128xf32, #tpu.memory_space<vmem>>, vector<16x128xf32>
    %cst_5 = arith.constant 0.000000e+00 : f32
    %4 = vector.broadcast %cst_5 : f32 to vector<16x128xf32>
    %5 = arith.maximumf %3, %4 : vector<16x128xf32>
    %c0_6 = arith.constant 0 : index
    %c0_7 = arith.constant 0 : index
    %6 = vector.load %arg2[%c0_6, %c0_7] : memref<128x64xf32, #tpu.memory_space<vmem>>, vector<128x64xf32>
    %cst_8 = arith.constant dense<0.000000e+00> : vector<16x64xf32>
    %7 = tpu.matmul %5, %6, %cst_8 {dimension_numbers = #tpu.dot_dimension_numbers<[1], [0], [0], [1], [0, 0, 1, 1], [], []>} : vector<16x128xf32>, vector<128x64xf32>, vector<16x64xf32> -> vector<16x64xf32>
    %c0_9 = arith.constant 0 : index
    %c0_10 = arith.constant 0 : index
    %8 = vector.load %arg1[%c0_9, %c0_10] : memref<16x128xf32, #tpu.memory_space<vmem>>, vector<16x128xf32>
    %cst_11 = arith.constant 0.000000e+00 : f32
    %9 = vector.broadcast %cst_11 : f32 to vector<16x128xf32>
    %10 = arith.maximumf %8, %9 : vector<16x128xf32>
    %c0_12 = arith.constant 0 : index
    %c0_13 = arith.constant 0 : index
    %11 = vector.load %arg3[%c0_12, %c0_13] : memref<128x64xf32, #tpu.memory_space<vmem>>, vector<128x64xf32>
    %cst_14 = arith.constant dense<0.000000e+00> : vector<16x64xf32>
    %12 = tpu.matmul %10, %11, %cst_14 {dimension_numbers = #tpu.dot_dimension_numbers<[1], [0], [0], [1], [0, 0, 1, 1], [], []>} : vector<16x128xf32>, vector<128x64xf32>, vector<16x64xf32> -> vector<16x64xf32>
    %13 = arith.addf %7, %12 : vector<16x64xf32>
    %cst_15 = arith.constant dense<0.000000e+00> : vector<1x64xf32>
    %14 = tpu.matmul %0, %13, %cst_15 {dimension_numbers = #tpu.dot_dimension_numbers<[1], [0], [0], [1], [0, 0, 1, 1], [], []>} : vector<1x16xf32>, vector<16x64xf32>, vector<1x64xf32> -> vector<1x64xf32>
    %15 = arith.mulf %13, %13 : vector<16x64xf32>
    %cst_16 = arith.constant dense<0.000000e+00> : vector<1x64xf32>
    %16 = tpu.matmul %0, %15, %cst_16 {dimension_numbers = #tpu.dot_dimension_numbers<[1], [0], [0], [1], [0, 0, 1, 1], [], []>} : vector<1x16xf32>, vector<16x64xf32>, vector<1x64xf32> -> vector<1x64xf32>
    %cst_17 = arith.constant dense<0.000000e+00> : vector<1x8xf32>
    %17 = tpu.matmul %14, %1, %cst_17 {dimension_numbers = #tpu.dot_dimension_numbers<[1], [0], [0], [1], [0, 0, 1, 1], [], []>} : vector<1x64xf32>, vector<64x8xf32>, vector<1x8xf32> -> vector<1x8xf32>
    %cst_18 = arith.constant 7.812500e-03 : f32
    %18 = vector.broadcast %cst_18 : f32 to vector<1x8xf32>
    %19 = arith.mulf %17, %18 : vector<1x8xf32>
    %cst_19 = arith.constant dense<0.000000e+00> : vector<1x8xf32>
    %20 = tpu.matmul %16, %1, %cst_19 {dimension_numbers = #tpu.dot_dimension_numbers<[1], [0], [0], [1], [0, 0, 1, 1], [], []>} : vector<1x64xf32>, vector<64x8xf32>, vector<1x8xf32> -> vector<1x8xf32>
    %cst_20 = arith.constant 7.812500e-03 : f32
    %21 = vector.broadcast %cst_20 : f32 to vector<1x8xf32>
    %22 = arith.mulf %20, %21 : vector<1x8xf32>
    %23 = arith.mulf %19, %19 : vector<1x8xf32>
    %24 = arith.subf %22, %23 : vector<1x8xf32>
    %cst_21 = arith.constant 0.000000e+00 : f32
    %25 = vector.broadcast %cst_21 : f32 to vector<1x8xf32>
    %26 = arith.maximumf %24, %25 : vector<1x8xf32>
    %cst_22 = arith.constant 9.99999974E-6 : f32
    %27 = vector.broadcast %cst_22 : f32 to vector<1x8xf32>
    %28 = arith.addf %26, %27 : vector<1x8xf32>
    %29 = math.rsqrt %28 : vector<1x8xf32>
    %cst_23 = arith.constant dense<0.000000e+00> : vector<1x64xf32>
    %30 = tpu.matmul %19, %2, %cst_23 {dimension_numbers = #tpu.dot_dimension_numbers<[1], [0], [0], [1], [0, 0, 1, 1], [], []>} : vector<1x8xf32>, vector<8x64xf32>, vector<1x64xf32> -> vector<1x64xf32>
    %cst_24 = arith.constant dense<0.000000e+00> : vector<1x64xf32>
    %31 = tpu.matmul %29, %2, %cst_24 {dimension_numbers = #tpu.dot_dimension_numbers<[1], [0], [0], [1], [0, 0, 1, 1], [], []>} : vector<1x8xf32>, vector<8x64xf32>, vector<1x64xf32> -> vector<1x64xf32>
    %32 = vector.broadcast %30 : vector<1x64xf32> to vector<16x64xf32>
    %33 = arith.subf %13, %32 : vector<16x64xf32>
    %34 = vector.broadcast %31 : vector<1x64xf32> to vector<16x64xf32>
    %35 = arith.mulf %33, %34 : vector<16x64xf32>
    %c0_25 = arith.constant 0 : index
    %c0_26 = arith.constant 0 : index
    %36 = vector.load %arg8[%c0_25, %c0_26] : memref<16x64xf32, #tpu.memory_space<vmem>>, vector<16x64xf32>
    tpu.vector_store %arg8[%c0_25, %c0_26], %35 {strides = array<i32>} : memref<16x64xf32, #tpu.memory_space<vmem>>, vector<16x64xf32>,
    %c0_27 = arith.constant 0 : index
    %c0_28 = arith.constant 0 : index
    %37 = vector.load %arg4[%c0_27, %c0_28] : memref<16x64xf32, #tpu.memory_space<vmem>>, vector<16x64xf32>
    %cst_29 = arith.constant 0.000000e+00 : f32
    %38 = vector.broadcast %cst_29 : f32 to vector<16x64xf32>
    %39 = arith.maximumf %37, %38 : vector<16x64xf32>
    %c0_30 = arith.constant 0 : index
    %c0_31 = arith.constant 0 : index
    %40 = vector.load %arg5[%c0_30, %c0_31] : memref<64x64xf32, #tpu.memory_space<vmem>>, vector<64x64xf32>
    %cst_32 = arith.constant dense<0.000000e+00> : vector<16x64xf32>
    %41 = tpu.matmul %39, %40, %cst_32 {dimension_numbers = #tpu.dot_dimension_numbers<[1], [0], [0], [1], [0, 0, 1, 1], [], []>} : vector<16x64xf32>, vector<64x64xf32>, vector<16x64xf32> -> vector<16x64xf32>
    %cst_33 = arith.constant dense<0.000000e+00> : vector<1x64xf32>
    %42 = tpu.matmul %0, %41, %cst_33 {dimension_numbers = #tpu.dot_dimension_numbers<[1], [0], [0], [1], [0, 0, 1, 1], [], []>} : vector<1x16xf32>, vector<16x64xf32>, vector<1x64xf32> -> vector<1x64xf32>
    %43 = arith.mulf %41, %41 : vector<16x64xf32>
    %cst_34 = arith.constant dense<0.000000e+00> : vector<1x64xf32>
    %44 = tpu.matmul %0, %43, %cst_34 {dimension_numbers = #tpu.dot_dimension_numbers<[1], [0], [0], [1], [0, 0, 1, 1], [], []>} : vector<1x16xf32>, vector<16x64xf32>, vector<1x64xf32> -> vector<1x64xf32>
    %cst_35 = arith.constant dense<0.000000e+00> : vector<1x8xf32>
    %45 = tpu.matmul %42, %1, %cst_35 {dimension_numbers = #tpu.dot_dimension_numbers<[1], [0], [0], [1], [0, 0, 1, 1], [], []>} : vector<1x64xf32>, vector<64x8xf32>, vector<1x8xf32> -> vector<1x8xf32>
    %cst_36 = arith.constant 7.812500e-03 : f32
    %46 = vector.broadcast %cst_36 : f32 to vector<1x8xf32>
    %47 = arith.mulf %45, %46 : vector<1x8xf32>
    %cst_37 = arith.constant dense<0.000000e+00> : vector<1x8xf32>
    %48 = tpu.matmul %44, %1, %cst_37 {dimension_numbers = #tpu.dot_dimension_numbers<[1], [0], [0], [1], [0, 0, 1, 1], [], []>} : vector<1x64xf32>, vector<64x8xf32>, vector<1x8xf32> -> vector<1x8xf32>
    %cst_38 = arith.constant 7.812500e-03 : f32
    %49 = vector.broadcast %cst_38 : f32 to vector<1x8xf32>
    %50 = arith.mulf %48, %49 : vector<1x8xf32>
    %51 = arith.mulf %47, %47 : vector<1x8xf32>
    %52 = arith.subf %50, %51 : vector<1x8xf32>
    %cst_39 = arith.constant 0.000000e+00 : f32
    %53 = vector.broadcast %cst_39 : f32 to vector<1x8xf32>
    %54 = arith.maximumf %52, %53 : vector<1x8xf32>
    %cst_40 = arith.constant 9.99999974E-6 : f32
    %55 = vector.broadcast %cst_40 : f32 to vector<1x8xf32>
    %56 = arith.addf %54, %55 : vector<1x8xf32>
    %57 = math.rsqrt %56 : vector<1x8xf32>
    %cst_41 = arith.constant dense<0.000000e+00> : vector<1x64xf32>
    %58 = tpu.matmul %47, %2, %cst_41 {dimension_numbers = #tpu.dot_dimension_numbers<[1], [0], [0], [1], [0, 0, 1, 1], [], []>} : vector<1x8xf32>, vector<8x64xf32>, vector<1x64xf32> -> vector<1x64xf32>
    %cst_42 = arith.constant dense<0.000000e+00> : vector<1x64xf32>
    %59 = tpu.matmul %57, %2, %cst_42 {dimension_numbers = #tpu.dot_dimension_numbers<[1], [0], [0], [1], [0, 0, 1, 1], [], []>} : vector<1x8xf32>, vector<8x64xf32>, vector<1x64xf32> -> vector<1x64xf32>
    %60 = vector.broadcast %58 : vector<1x64xf32> to vector<16x64xf32>
    %61 = arith.subf %41, %60 : vector<16x64xf32>
    %62 = vector.broadcast %59 : vector<1x64xf32> to vector<16x64xf32>
    %63 = arith.mulf %61, %62 : vector<16x64xf32>
    %c0_43 = arith.constant 0 : index
    %c0_44 = arith.constant 0 : index
    %64 = vector.load %arg9[%c0_43, %c0_44] : memref<16x64xf32, #tpu.memory_space<vmem>>, vector<16x64xf32>
    tpu.vector_store %arg9[%c0_43, %c0_44], %63 {strides = array<i32>} : memref<16x64xf32, #tpu.memory_space<vmem>>, vector<16x64xf32>,
    return
  }
}

</mosaic_0001>

<llo_original>
// kernel: tpu_custom_call.1
$region0: #{tpu_custom_call.1}
  #allocation0 [shape = 'u32[]', space=smem, size = 0x4, offset = 0x4, fixed_abs, tag = 'smem constant byte address 0x4 - core index']
  #allocation1 [shape = 'u32[144,128]{1,0:T(1,128)}', space=vmem, size = 0x12000, scoped, tag = 'internal scratch']
  %s0 = inlined_call_operand.vmem [shape: f32[16,128], index: 0, kind: input, shape index: {}]
  %s1 = inlined_call_operand.vmem [shape: f32[16,128], index: 1, kind: input, shape index: {}]
  %s2 = inlined_call_operand.vmem [shape: f32[128,64], index: 2, kind: input, shape index: {}]
  %s3 = inlined_call_operand.vmem [shape: f32[128,64], index: 3, kind: input, shape index: {}]
  %s4 = inlined_call_operand.vmem [shape: f32[16,64], index: 4, kind: input, shape index: {}]
  %s5 = inlined_call_operand.vmem [shape: f32[64,64], index: 5, kind: input, shape index: {}]
  %s6 = inlined_call_operand.vmem [shape: f32[64,8], index: 6, kind: input, shape index: {}]
  %s7 = inlined_call_operand.vmem [shape: f32[8,64], index: 7, kind: input, shape index: {}]
  %s8 = inlined_call_operand.hbm [shape: f32[16,64], index: 8, kind: output, shape index: {0}]
  %s9 = inlined_call_operand.hbm [shape: f32[16,64], index: 9, kind: output, shape index: {1}]
  %10 = xla_tuple %s8, %s9
  %s11 = sld [smem:[#allocation0]]
  $region50: #{tpu_custom_call.1} parent=0
    _
  %s13 = ssub.s32 1, %s11
  %s14 = scalar_select 0, %s13, %s11
  $region1: #{tpu_custom_call.1} parent=0
    #allocation2 [shape = 'u8[8192]{0}', space=vmem, size = 0x2000, scoped, tag = 'output window, operand 0, single buffered']
    #allocation3 [shape = 's32[1]{0}', space=sflag, size = 0x4, scoped, tag = 'scoped memory for tpu_custom_call.1']
    #allocation4 [shape = 'u8[8192]{0}', space=vmem, size = 0x2000, scoped, tag = 'output window, operand 1, single buffered']
    #allocation5 [shape = 's32[1]{0}', space=sflag, size = 0x4, scoped, tag = 'scoped memory for tpu_custom_call.1']
    %15 = vsyncpa [#allocation3], 0
    %16 = vsyncpa [#allocation5], 0
    // Predicated region
    $region2: #{tpu_custom_call.1} parent=1 // pred_check
      _
    $region3: #{tpu_custom_call.1} parent=1 // pred_check_branch
      %18 = sbr.rel (0) target = $region5
    $region4: #{tpu_custom_call.1} parent=1 // pred_region
      _
    $region5: #{tpu_custom_call.1} parent=1 // pred_fallthru
      _
    // Predicated region
    $region6: #{tpu_custom_call.1} parent=1 // pred_check
      _
    $region7: #{tpu_custom_call.1} parent=1 // pred_check_branch
      %20 = sbr.rel (0) target = $region9
    $region8: #{tpu_custom_call.1} parent=1 // pred_region
      _
    $region9: #{tpu_custom_call.1} parent=1 // pred_fallthru
      _
    // Predicated region
    $region10: #{tpu_custom_call.1} parent=1 // pred_check
      _
    $region11: #{tpu_custom_call.1} parent=1 // pred_check_branch
      %22 = sbr.rel (0) target = $region13
    $region12: #{tpu_custom_call.1} parent=1 // pred_region
      _
    $region13: #{tpu_custom_call.1} parent=1 // pred_fallthru
      _
    // Predicated region
    $region14: #{tpu_custom_call.1} parent=1 // pred_check
      _
    $region15: #{tpu_custom_call.1} parent=1 // pred_check_branch
      %24 = sbr.rel (0) target = $region17
    $region16: #{tpu_custom_call.1} parent=1 // pred_region
      _
    $region17: #{tpu_custom_call.1} parent=1 // pred_fallthru
      _
    // Predicated region
    $region18: #{tpu_custom_call.1} parent=1 // pred_check
      _
    $region19: #{tpu_custom_call.1} parent=1 // pred_check_branch
      %26 = sbr.rel (0) target = $region21
    $region20: #{tpu_custom_call.1} parent=1 // pred_region
      _
    $region21: #{tpu_custom_call.1} parent=1 // pred_fallthru
      _
    // Predicated region
    $region22: #{tpu_custom_call.1} parent=1 // pred_check
      _
    $region23: #{tpu_custom_call.1} parent=1 // pred_check_branch
      %28 = sbr.rel (0) target = $region25
    $region24: #{tpu_custom_call.1} parent=1 // pred_region
      _
    $region25: #{tpu_custom_call.1} parent=1 // pred_fallthru
      _
    // Predicated region
    $region26: #{tpu_custom_call.1} parent=1 // pred_check
      _
    $region27: #{tpu_custom_call.1} parent=1 // pred_check_branch
      %30 = sbr.rel (0) target = $region29
    $region28: #{tpu_custom_call.1} parent=1 // pred_region
      _
    $region29: #{tpu_custom_call.1} parent=1 // pred_fallthru
      _
    // Predicated region
    $region30: #{tpu_custom_call.1} parent=1 // pred_check
      _
    $region31: #{tpu_custom_call.1} parent=1 // pred_check_branch
      %32 = sbr.rel (0) target = $region33
    $region32: #{tpu_custom_call.1} parent=1 // pred_region
      _
    $region33: #{tpu_custom_call.1} parent=1 // pred_fallthru
      _
    %v33 = vld [vmem:[%s6] sm:$0xff]
    %v34 = vld [vmem:[%s6 + $0x8] sm:$0xff]
    %v35 = vld [vmem:[%s6 + $0x10] sm:$0xff]
    %v36 = vld [vmem:[%s6 + $0x18] sm:$0xff]
    %v37 = vld [vmem:[%s6 + $0x20] sm:$0xff]
    %v38 = vld [vmem:[%s6 + $0x28] sm:$0xff]
    %v39 = vld [vmem:[%s6 + $0x30] sm:$0xff]
    %v40 = vld [vmem:[%s6 + $0x38] sm:$0xff]
    %v41 = vld [vmem:[%s7] sm:$0xff]
    %v42 = vld [vmem:[%s0] sm:$0xff]
    %v43 = vld [vmem:[%s0 + $0x8] sm:$0xff]
    %v44 = vmax.f32 %v42, 0.0
    %v45 = vmax.f32 %v43, 0.0
    %v46 = vld [vmem:[%s2] sm:$0xff]
    %v47 = vld [vmem:[%s2 + $0x8] sm:$0xff]
    %v48 = vld [vmem:[%s2 + $0x10] sm:$0xff]
    %v49 = vld [vmem:[%s2 + $0x18] sm:$0xff]
    %v50 = vld [vmem:[%s2 + $0x20] sm:$0xff]
    %v51 = vld [vmem:[%s2 + $0x28] sm:$0xff]
    %v52 = vld [vmem:[%s2 + $0x30] sm:$0xff]
    %v53 = vld [vmem:[%s2 + $0x38] sm:$0xff]
    %v54 = vld [vmem:[%s2 + $0x40] sm:$0xff]
    %v55 = vld [vmem:[%s2 + $0x48] sm:$0xff]
    %v56 = vld [vmem:[%s2 + $0x50] sm:$0xff]
    %v57 = vld [vmem:[%s2 + $0x58] sm:$0xff]
    %v58 = vld [vmem:[%s2 + $0x60] sm:$0xff]
    %v59 = vld [vmem:[%s2 + $0x68] sm:$0xff]
    %v60 = vld [vmem:[%s2 + $0x70] sm:$0xff]
    %v61 = vld [vmem:[%s2 + $0x78] sm:$0xff]
    %v62 = vld [vmem:[%s1] sm:$0xff]
    %v63 = vld [vmem:[%s1 + $0x8] sm:$0xff]
    %v64 = vmax.f32 %v62, 0.0
    %v65 = vmax.f32 %v63, 0.0
    %v66 = vld [vmem:[%s3] sm:$0xff]
    %v67 = vld [vmem:[%s3 + $0x8] sm:$0xff]
    %v68 = vld [vmem:[%s3 + $0x10] sm:$0xff]
    %v69 = vld [vmem:[%s3 + $0x18] sm:$0xff]
    %v70 = vld [vmem:[%s3 + $0x20] sm:$0xff]
    %v71 = vld [vmem:[%s3 + $0x28] sm:$0xff]
    %v72 = vld [vmem:[%s3 + $0x30] sm:$0xff]
    %v73 = vld [vmem:[%s3 + $0x38] sm:$0xff]
    %v74 = vld [vmem:[%s3 + $0x40] sm:$0xff]
    %v75 = vld [vmem:[%s3 + $0x48] sm:$0xff]
    %v76 = vld [vmem:[%s3 + $0x50] sm:$0xff]
    %v77 = vld [vmem:[%s3 + $0x58] sm:$0xff]
    %v78 = vld [vmem:[%s3 + $0x60] sm:$0xff]
    %v79 = vld [vmem:[%s3 + $0x68] sm:$0xff]
    %v80 = vld [vmem:[%s3 + $0x70] sm:$0xff]
    %v81 = vld [vmem:[%s3 + $0x78] sm:$0xff]
    %82 = vmatprep.subr.mxu0 0.0
    %83 = vmatpush1.msra.mxu0 %v66
    %84 = vmatprep.subr.mxu0 0.0
    %85 = vmatpush1.msra.mxu0 %v67
    %86 = vmatprep.subr.mxu0 0.0
    %87 = vmatpush1.msra.mxu0 %v68
    %88 = vmatprep.subr.mxu0 0.0
    %89 = vmatpush1.msra.mxu0 %v69
    %90 = vmatprep.subr.mxu0 0.0
    %91 = vmatpush1.msra.mxu0 %v70
    %92 = vmatprep.subr.mxu0 0.0
    %93 = vmatpush1.msra.mxu0 %v71
    %94 = vmatprep.subr.mxu0 0.0
    %95 = vmatpush1.msra.mxu0 %v72
    %96 = vmatprep.subr.mxu0 0.0
    %97 = vmatpush1.msra.mxu0 %v73
    %98 = vmatprep.subr.mxu0 0.0
    %99 = vmatpush1.msra.mxu0 %v74
    %100 = vmatprep.subr.mxu0 0.0
    %101 = vmatpush1.msra.mxu0 %v75
    %102 = vmatprep.subr.mxu0 0.0
    %103 = vmatpush1.msra.mxu0 %v76
    %104 = vmatprep.subr.mxu0 0.0
    %105 = vmatpush1.msra.mxu0 %v77
    %106 = vmatprep.subr.mxu0 0.0
    %107 = vmatpush1.msra.mxu0 %v78
    %108 = vmatprep.subr.mxu0 0.0
    %109 = vmatpush1.msra.mxu0 %v79
    %110 = vmatprep.subr.mxu0 0.0
    %111 = vmatpush1.msra.mxu0 %v80
    %112 = vmatprep.subr.mxu0 0.0
    %113 = vmatpush1.msra.mxu0 %v81
    %114 = vmatprep.subr.mxu0 0.0
    %115 = vmatpush1.msra.mxu0 0.0
    %116 = vmatprep.subr.mxu0 0.0
    %117 = vmatpush1.msra.mxu0 0.0
    %118 = vmatprep.subr.mxu0 0.0
    %119 = vmatpush1.msra.mxu0 0.0
    %120 = vmatprep.subr.mxu0 0.0
    %121 = vmatpush1.msra.mxu0 0.0
    %122 = vmatprep.subr.mxu0 0.0
    %123 = vmatpush1.msra.mxu0 0.0
    %124 = vmatprep.subr.mxu0 0.0
    %125 = vmatpush1.msra.mxu0 0.0
    %126 = vmatprep.subr.mxu0 0.0
    %127 = vmatpush1.msra.mxu0 0.0
    %128 = vmatprep.subr.mxu0 0.0
    %129 = vmatpush1.msra.mxu0 0.0
    %130 = vmatprep.subr.mxu0 0.0
    %131 = vmatpush1.msra.mxu0 0.0
    %132 = vmatprep.subr.mxu0 0.0
    %133 = vmatpush1.msra.mxu0 0.0
    %134 = vmatprep.subr.mxu0 0.0
    %135 = vmatpush1.msra.mxu0 0.0
    %136 = vmatprep.subr.mxu0 0.0
    %137 = vmatpush1.msra.mxu0 0.0
    %138 = vmatprep.subr.mxu0 0.0
    %139 = vmatpush1.msra.mxu0 0.0
    %140 = vmatprep.subr.mxu0 0.0
    %141 = vmatpush1.msra.mxu0 0.0
    %142 = vmatprep.subr.mxu0 0.0
    %143 = vmatpush1.msra.mxu0 0.0
    %144 = vmatprep.subr.mxu0 0.0
    %145 = vmatpush1.msra.mxu0 0.0
    %146 = vmatprep.mubr.f32.mxu0 0.0
    %147 = vmatmul.mubr.f32.gmra.mrb[0].mxu0 %v64
    %v148 = vpop.f32.mrb[0].mxu0
    %v149 = vadd.f32 0.0, %v148
    %v150 = vpop.f32.mrb[0].mxu0
    %151 = vmatprep.mubr.f32.mxu0 0.0
    %152 = vmatmul.mubr.f32.gmra.mrb[0].mxu0 %v65
    %v153 = vpop.f32.mrb[0].mxu0
    %v154 = vadd.f32 0.0, %v153
    %v155 = vpop.f32.mrb[0].mxu0
    %156 = vdwg.mxu0
    %157 = vmatprep.subr.mxu0 0.0
    %158 = vmatpush1.msra.mxu0 %v46
    %159 = vmatprep.subr.mxu0 0.0
    %160 = vmatpush1.msra.mxu0 %v47
    %161 = vmatprep.subr.mxu0 0.0
    %162 = vmatpush1.msra.mxu0 %v48
    %163 = vmatprep.subr.mxu0 0.0
    %164 = vmatpush1.msra.mxu0 %v49
    %165 = vmatprep.subr.mxu0 0.0
    %166 = vmatpush1.msra.mxu0 %v50
    %167 = vmatprep.subr.mxu0 0.0
    %168 = vmatpush1.msra.mxu0 %v51
    %169 = vmatprep.subr.mxu0 0.0
    %170 = vmatpush1.msra.mxu0 %v52
    %171 = vmatprep.subr.mxu0 0.0
    %172 = vmatpush1.msra.mxu0 %v53
    %173 = vmatprep.subr.mxu0 0.0
    %174 = vmatpush1.msra.mxu0 %v54
    %175 = vmatprep.subr.mxu0 0.0
    %176 = vmatpush1.msra.mxu0 %v55
    %177 = vmatprep.subr.mxu0 0.0
    %178 = vmatpush1.msra.mxu0 %v56
    %179 = vmatprep.subr.mxu0 0.0
    %180 = vmatpush1.msra.mxu0 %v57
    %181 = vmatprep.subr.mxu0 0.0
    %182 = vmatpush1.msra.mxu0 %v58
    %183 = vmatprep.subr.mxu0 0.0
    %184 = vmatpush1.msra.mxu0 %v59
    %185 = vmatprep.subr.mxu0 0.0
    %186 = vmatpush1.msra.mxu0 %v60
    %187 = vmatprep.subr.mxu0 0.0
    %188 = vmatpush1.msra.mxu0 %v61
    %189 = vmatprep.subr.mxu0 0.0
    %190 = vmatpush1.msra.mxu0 0.0
    %191 = vmatprep.subr.mxu0 0.0
    %192 = vmatpush1.msra.mxu0 0.0
    %193 = vmatprep.subr.mxu0 0.0
    %194 = vmatpush1.msra.mxu0 0.0
    %195 = vmatprep.subr.mxu0 0.0
    %196 = vmatpush1.msra.mxu0 0.0
    %197 = vmatprep.subr.mxu0 0.0
    %198 = vmatpush1.msra.mxu0 0.0
    %199 = vmatprep.subr.mxu0 0.0
    %200 = vmatpush1.msra.mxu0 0.0
    %201 = vmatprep.subr.mxu0 0.0
    %202 = vmatpush1.msra.mxu0 0.0
    %203 = vmatprep.subr.mxu0 0.0
    %204 = vmatpush1.msra.mxu0 0.0
    %205 = vmatprep.subr.mxu0 0.0
    %206 = vmatpush1.msra.mxu0 0.0
    %207 = vmatprep.subr.mxu0 0.0
    %208 = vmatpush1.msra.mxu0 0.0
    %209 = vmatprep.subr.mxu0 0.0
    %210 = vmatpush1.msra.mxu0 0.0
    %211 = vmatprep.subr.mxu0 0.0
    %212 = vmatpush1.msra.mxu0 0.0
    %213 = vmatprep.subr.mxu0 0.0
    %214 = vmatpush1.msra.mxu0 0.0
    %215 = vmatprep.subr.mxu0 0.0
    %216 = vmatpush1.msra.mxu0 0.0
    %217 = vmatprep.subr.mxu0 0.0
    %218 = vmatpush1.msra.mxu0 0.0
    %219 = vmatprep.subr.mxu0 0.0
    %220 = vmatpush1.msra.mxu0 0.0
    %221 = vmatprep.mubr.f32.mxu0 0.0
    %222 = vmatmul.mubr.f32.gmra.mrb[0].mxu0 %v44
    %v223 = vpop.f32.mrb[0].mxu0
    %v224 = vadd.f32 %v149, %v223
    %v225 = vpop.f32.mrb[0].mxu0
    %226 = vmatprep.mubr.f32.mxu0 0.0
    %227 = vmatmul.mubr.f32.gmra.mrb[0].mxu0 %v45
    %v228 = vpop.f32.mrb[0].mxu0
    %v229 = vadd.f32 %v154, %v228
    %v230 = vpop.f32.mrb[0].mxu0
    %231 = vdwg.mxu0
    %vm232 = vcmask 130048
    %v234 = vsel %vm232, 1.0, 0
    %236 = vmatprep.subr.mxu0 0.0
    %237 = vmatpush1.msra.mxu0 %v224
    %238 = vmatprep.subr.mxu0 0.0
    %239 = vmatpush1.msra.mxu0 %v229
    %240 = vmatprep.subr.mxu0 0.0
    %241 = vmatpush1.msra.mxu0 0.0
    %242 = vmatprep.subr.mxu0 0.0
    %243 = vmatpush1.msra.mxu0 0.0
    %244 = vmatprep.subr.mxu0 0.0
    %245 = vmatpush1.msra.mxu0 0.0
    %246 = vmatprep.subr.mxu0 0.0
    %247 = vmatpush1.msra.mxu0 0.0
    %248 = vmatprep.subr.mxu0 0.0
    %249 = vmatpush1.msra.mxu0 0.0
    %250 = vmatprep.subr.mxu0 0.0
    %251 = vmatpush1.msra.mxu0 0.0
    %252 = vmatprep.subr.mxu0 0.0
    %253 = vmatpush1.msra.mxu0 0.0
    %254 = vmatprep.subr.mxu0 0.0
    %255 = vmatpush1.msra.mxu0 0.0
    %256 = vmatprep.subr.mxu0 0.0
    %257 = vmatpush1.msra.mxu0 0.0
    %258 = vmatprep.subr.mxu0 0.0
    %259 = vmatpush1.msra.mxu0 0.0
    %260 = vmatprep.subr.mxu0 0.0
    %261 = vmatpush1.msra.mxu0 0.0
    %262 = vmatprep.subr.mxu0 0.0
    %263 = vmatpush1.msra.mxu0 0.0
    %264 = vmatprep.subr.mxu0 0.0
    %265 = vmatpush1.msra.mxu0 0.0
    %266 = vmatprep.subr.mxu0 0.0
    %267 = vmatpush1.msra.mxu0 0.0
    %268 = vmatprep.subr.mxu0 0.0
    %269 = vmatpush1.msra.mxu0 0.0
    %270 = vmatprep.subr.mxu0 0.0
    %271 = vmatpush1.msra.mxu0 0.0
    %272 = vmatprep.subr.mxu0 0.0
    %273 = vmatpush1.msra.mxu0 0.0
    %274 = vmatprep.subr.mxu0 0.0
    %275 = vmatpush1.msra.mxu0 0.0
    %276 = vmatprep.subr.mxu0 0.0
    %277 = vmatpush1.msra.mxu0 0.0
    %278 = vmatprep.subr.mxu0 0.0
    %279 = vmatpush1.msra.mxu0 0.0
    %280 = vmatprep.subr.mxu0 0.0
    %281 = vmatpush1.msra.mxu0 0.0
    %282 = vmatprep.subr.mxu0 0.0
    %283 = vmatpush1.msra.mxu0 0.0
    %284 = vmatprep.subr.mxu0 0.0
    %285 = vmatpush1.msra.mxu0 0.0
    %286 = vmatprep.subr.mxu0 0.0
    %287 = vmatpush1.msra.mxu0 0.0
    %288 = vmatprep.subr.mxu0 0.0
    %289 = vmatpush1.msra.mxu0 0.0
    %290 = vmatprep.subr.mxu0 0.0
    %291 = vmatpush1.msra.mxu0 0.0
    %292 = vmatprep.subr.mxu0 0.0
    %293 = vmatpush1.msra.mxu0 0.0
    %294 = vmatprep.subr.mxu0 0.0
    %295 = vmatpush1.msra.mxu0 0.0
    %296 = vmatprep.subr.mxu0 0.0
    %297 = vmatpush1.msra.mxu0 0.0
    %298 = vmatprep.subr.mxu0 0.0
    %299 = vmatpush1.msra.mxu0 0.0
    %300 = vmatprep.mubr.f32.mxu0 0.0
    %301 = vmatmul.mubr.f32.gmra.mrb[0].mxu0 %v234
    %v302 = vpop.f32.mrb[0].mxu0
    %v303 = vadd.f32 0.0, %v302
    %v304 = vpop.f32.mrb[0].mxu0
    %305 = vdwg.mxu0
    %v306 = vmul.f32 %v224, %v224
    %v307 = vmul.f32 %v229, %v229
    %308 = vmatprep.subr.mxu0 0.0
    %309 = vmatpush1.msra.mxu0 %v306
    %310 = vmatprep.subr.mxu0 0.0
    %311 = vmatpush1.msra.mxu0 %v307
    %312 = vmatprep.subr.mxu0 0.0
    %313 = vmatpush1.msra.mxu0 0.0
    %314 = vmatprep.subr.mxu0 0.0
    %315 = vmatpush1.msra.mxu0 0.0
    %316 = vmatprep.subr.mxu0 0.0
    %317 = vmatpush1.msra.mxu0 0.0
    %318 = vmatprep.subr.mxu0 0.0
    %319 = vmatpush1.msra.mxu0 0.0
    %320 = vmatprep.subr.mxu0 0.0
    %321 = vmatpush1.msra.mxu0 0.0
    %322 = vmatprep.subr.mxu0 0.0
    %323 = vmatpush1.msra.mxu0 0.0
    %324 = vmatprep.subr.mxu0 0.0
    %325 = vmatpush1.msra.mxu0 0.0
    %326 = vmatprep.subr.mxu0 0.0
    %327 = vmatpush1.msra.mxu0 0.0
    %328 = vmatprep.subr.mxu0 0.0
    %329 = vmatpush1.msra.mxu0 0.0
    %330 = vmatprep.subr.mxu0 0.0
    %331 = vmatpush1.msra.mxu0 0.0
    %332 = vmatprep.subr.mxu0 0.0
    %333 = vmatpush1.msra.mxu0 0.0
    %334 = vmatprep.subr.mxu0 0.0
    %335 = vmatpush1.msra.mxu0 0.0
    %336 = vmatprep.subr.mxu0 0.0
    %337 = vmatpush1.msra.mxu0 0.0
    %338 = vmatprep.subr.mxu0 0.0
    %339 = vmatpush1.msra.mxu0 0.0
    %340 = vmatprep.subr.mxu0 0.0
    %341 = vmatpush1.msra.mxu0 0.0
    %342 = vmatprep.subr.mxu0 0.0
    %343 = vmatpush1.msra.mxu0 0.0
    %344 = vmatprep.subr.mxu0 0.0
    %345 = vmatpush1.msra.mxu0 0.0
    %346 = vmatprep.subr.mxu0 0.0
    %347 = vmatpush1.msra.mxu0 0.0
    %348 = vmatprep.subr.mxu0 0.0
    %349 = vmatpush1.msra.mxu0 0.0
    %350 = vmatprep.subr.mxu0 0.0
    %351 = vmatpush1.msra.mxu0 0.0
    %352 = vmatprep.subr.mxu0 0.0
    %353 = vmatpush1.msra.mxu0 0.0
    %354 = vmatprep.subr.mxu0 0.0
    %355 = vmatpush1.msra.mxu0 0.0
    %356 = vmatprep.subr.mxu0 0.0
    %357 = vmatpush1.msra.mxu0 0.0
    %358 = vmatprep.subr.mxu0 0.0
    %359 = vmatpush1.msra.mxu0 0.0
    %360 = vmatprep.subr.mxu0 0.0
    %361 = vmatpush1.msra.mxu0 0.0
    %362 = vmatprep.subr.mxu0 0.0
    %363 = vmatpush1.msra.mxu0 0.0
    %364 = vmatprep.subr.mxu0 0.0
    %365 = vmatpush1.msra.mxu0 0.0
    %366 = vmatprep.subr.mxu0 0.0
    %367 = vmatpush1.msra.mxu0 0.0
    %368 = vmatprep.subr.mxu0 0.0
    %369 = vmatpush1.msra.mxu0 0.0
    %370 = vmatprep.subr.mxu0 0.0
    %371 = vmatpush1.msra.mxu0 0.0
    %372 = vmatprep.mubr.f32.mxu0 0.0
    %373 = vmatmul.mubr.f32.gmra.mrb[0].mxu0 %v234
    %v374 = vpop.f32.mrb[0].mxu0
    %v375 = vadd.f32 0.0, %v374
    %v376 = vpop.f32.mrb[0].mxu0
    %377 = vdwg.mxu0
    %vm378 = vcmask 523264
    %v380 = vsel %vm378, %v303, 0
    %382 = vmatprep.subr.mxu0 0.0
    %383 = vmatpush1.msra.mxu0 %v33
    %384 = vmatprep.subr.mxu0 0.0
    %385 = vmatpush1.msra.mxu0 %v34
    %386 = vmatprep.subr.mxu0 0.0
    %387 = vmatpush1.msra.mxu0 %v35
    %388 = vmatprep.subr.mxu0 0.0
    %389 = vmatpush1.msra.mxu0 %v36
    %390 = vmatprep.subr.mxu0 0.0
    %391 = vmatpush1.msra.mxu0 %v37
    %392 = vmatprep.subr.mxu0 0.0
    %393 = vmatpush1.msra.mxu0 %v38
    %394 = vmatprep.subr.mxu0 0.0
    %395 = vmatpush1.msra.mxu0 %v39
    %396 = vmatprep.subr.mxu0 0.0
    %397 = vmatpush1.msra.mxu0 %v40
    %398 = vmatprep.subr.mxu0 0.0
    %399 = vmatpush1.msra.mxu0 0.0
    %400 = vmatprep.subr.mxu0 0.0
    %401 = vmatpush1.msra.mxu0 0.0
    %402 = vmatprep.subr.mxu0 0.0
    %403 = vmatpush1.msra.mxu0 0.0
    %404 = vmatprep.subr.mxu0 0.0
    %405 = vmatpush1.msra.mxu0 0.0
    %406 = vmatprep.subr.mxu0 0.0
    %407 = vmatpush1.msra.mxu0 0.0
    %408 = vmatprep.subr.mxu0 0.0
    %409 = vmatpush1.msra.mxu0 0.0
    %410 = vmatprep.subr.mxu0 0.0
    %411 = vmatpush1.msra.mxu0 0.0
    %412 = vmatprep.subr.mxu0 0.0
    %413 = vmatpush1.msra.mxu0 0.0
    %414 = vmatprep.subr.mxu0 0.0
    %415 = vmatpush1.msra.mxu0 0.0
    %416 = vmatprep.subr.mxu0 0.0
    %417 = vmatpush1.msra.mxu0 0.0
    %418 = vmatprep.subr.mxu0 0.0
    %419 = vmatpush1.msra.mxu0 0.0
    %420 = vmatprep.subr.mxu0 0.0
    %421 = vmatpush1.msra.mxu0 0.0
    %422 = vmatprep.subr.mxu0 0.0
    %423 = vmatpush1.msra.mxu0 0.0
    %424 = vmatprep.subr.mxu0 0.0
    %425 = vmatpush1.msra.mxu0 0.0
    %426 = vmatprep.subr.mxu0 0.0
    %427 = vmatpush1.msra.mxu0 0.0
    %428 = vmatprep.subr.mxu0 0.0
    %429 = vmatpush1.msra.mxu0 0.0
    %430 = vmatprep.subr.mxu0 0.0
    %431 = vmatpush1.msra.mxu0 0.0
    %432 = vmatprep.subr.mxu0 0.0
    %433 = vmatpush1.msra.mxu0 0.0
    %434 = vmatprep.subr.mxu0 0.0
    %435 = vmatpush1.msra.mxu0 0.0
    %436 = vmatprep.subr.mxu0 0.0
    %437 = vmatpush1.msra.mxu0 0.0
    %438 = vmatprep.subr.mxu0 0.0
    %439 = vmatpush1.msra.mxu0 0.0
    %440 = vmatprep.subr.mxu0 0.0
    %441 = vmatpush1.msra.mxu0 0.0
    %442 = vmatprep.subr.mxu0 0.0
    %443 = vmatpush1.msra.mxu0 0.0
    %444 = vmatprep.subr.mxu0 0.0
    %445 = vmatpush1.msra.mxu0 0.0
    %446 = vmatprep.mubr.f32.mxu0 0.0
    %447 = vmatmul.mubr.f32.gmra.mrb[0].mxu0 %v380
    %v448 = vpop.f32.mrb[0].mxu0
    %v449 = vadd.f32 0.0, %v448
    %v450 = vpop.f32.mrb[0].mxu0
    %451 = vdwg.mxu0
    %v452 = vmul.f32 %v449, 0.0078125
    %v454 = vsel %vm378, %v375, 0
    %456 = vmatprep.subr.mxu0 0.0
    %457 = vmatpush1.msra.mxu0 %v33
    %458 = vmatprep.subr.mxu0 0.0
    %459 = vmatpush1.msra.mxu0 %v34
    %460 = vmatprep.subr.mxu0 0.0
    %461 = vmatpush1.msra.mxu0 %v35
    %462 = vmatprep.subr.mxu0 0.0
    %463 = vmatpush1.msra.mxu0 %v36
    %464 = vmatprep.subr.mxu0 0.0
    %465 = vmatpush1.msra.mxu0 %v37
    %466 = vmatprep.subr.mxu0 0.0
    %467 = vmatpush1.msra.mxu0 %v38
    %468 = vmatprep.subr.mxu0 0.0
    %469 = vmatpush1.msra.mxu0 %v39
    %470 = vmatprep.subr.mxu0 0.0
    %471 = vmatpush1.msra.mxu0 %v40
    %472 = vmatprep.subr.mxu0 0.0
    %473 = vmatpush1.msra.mxu0 0.0
    %474 = vmatprep.subr.mxu0 0.0
    %475 = vmatpush1.msra.mxu0 0.0
    %476 = vmatprep.subr.mxu0 0.0
    %477 = vmatpush1.msra.mxu0 0.0
    %478 = vmatprep.subr.mxu0 0.0
    %479 = vmatpush1.msra.mxu0 0.0
    %480 = vmatprep.subr.mxu0 0.0
    %481 = vmatpush1.msra.mxu0 0.0
    %482 = vmatprep.subr.mxu0 0.0
    %483 = vmatpush1.msra.mxu0 0.0
    %484 = vmatprep.subr.mxu0 0.0
    %485 = vmatpush1.msra.mxu0 0.0
    %486 = vmatprep.subr.mxu0 0.0
    %487 = vmatpush1.msra.mxu0 0.0
    %488 = vmatprep.subr.mxu0 0.0
    %489 = vmatpush1.msra.mxu0 0.0
    %490 = vmatprep.subr.mxu0 0.0
    %491 = vmatpush1.msra.mxu0 0.0
    %492 = vmatprep.subr.mxu0 0.0
    %493 = vmatpush1.msra.mxu0 0.0
    %494 = vmatprep.subr.mxu0 0.0
    %495 = vmatpush1.msra.mxu0 0.0
    %496 = vmatprep.subr.mxu0 0.0
    %497 = vmatpush1.msra.mxu0 0.0
    %498 = vmatprep.subr.mxu0 0.0
    %499 = vmatpush1.msra.mxu0 0.0
    %500 = vmatprep.subr.mxu0 0.0
    %501 = vmatpush1.msra.mxu0 0.0
    %502 = vmatprep.subr.mxu0 0.0
    %503 = vmatpush1.msra.mxu0 0.0
    %504 = vmatprep.subr.mxu0 0.0
    %505 = vmatpush1.msra.mxu0 0.0
    %506 = vmatprep.subr.mxu0 0.0
    %507 = vmatpush1.msra.mxu0 0.0
    %508 = vmatprep.subr.mxu0 0.0
    %509 = vmatpush1.msra.mxu0 0.0
    %510 = vmatprep.subr.mxu0 0.0
    %511 = vmatpush1.msra.mxu0 0.0
    %512 = vmatprep.subr.mxu0 0.0
    %513 = vmatpush1.msra.mxu0 0.0
    %514 = vmatprep.subr.mxu0 0.0
    %515 = vmatpush1.msra.mxu0 0.0
    %516 = vmatprep.subr.mxu0 0.0
    %517 = vmatpush1.msra.mxu0 0.0
    %518 = vmatprep.subr.mxu0 0.0
    %519 = vmatpush1.msra.mxu0 0.0
    %520 = vmatprep.mubr.f32.mxu0 0.0
    %521 = vmatmul.mubr.f32.gmra.mrb[0].mxu0 %v454
    %v522 = vpop.f32.mrb[0].mxu0
    %v523 = vadd.f32 0.0, %v522
    %v524 = vpop.f32.mrb[0].mxu0
    %525 = vdwg.mxu0
    %v526 = vmul.f32 %v523, 0.0078125
    %v527 = vmul.f32 %v452, %v452
    %v528 = vsub.f32 %v526, %v527
    %v529 = vmax.f32 %v528, 0.0
    %v530 = vadd.f32 %v529, 1e-05
    %v531 = vrsqrt.pop %v530
    %vm532 = vcmask 64512
    %v534 = vsel %vm532, %v452, 0
    %536 = vmatprep.subr.mxu0 0.0
    %537 = vmatpush1.msra.mxu0 %v41
    %538 = vmatprep.subr.mxu0 0.0
    %539 = vmatpush1.msra.mxu0 0.0
    %540 = vmatprep.subr.mxu0 0.0
    %541 = vmatpush1.msra.mxu0 0.0
    %542 = vmatprep.subr.mxu0 0.0
    %543 = vmatpush1.msra.mxu0 0.0
    %544 = vmatprep.subr.mxu0 0.0
    %545 = vmatpush1.msra.mxu0 0.0
    %546 = vmatprep.subr.mxu0 0.0
    %547 = vmatpush1.msra.mxu0 0.0
    %548 = vmatprep.subr.mxu0 0.0
    %549 = vmatpush1.msra.mxu0 0.0
    %550 = vmatprep.subr.mxu0 0.0
    %551 = vmatpush1.msra.mxu0 0.0
    %552 = vmatprep.subr.mxu0 0.0
    %553 = vmatpush1.msra.mxu0 0.0
    %554 = vmatprep.subr.mxu0 0.0
    %555 = vmatpush1.msra.mxu0 0.0
    %556 = vmatprep.subr.mxu0 0.0
    %557 = vmatpush1.msra.mxu0 0.0
    %558 = vmatprep.subr.mxu0 0.0
    %559 = vmatpush1.msra.mxu0 0.0
    %560 = vmatprep.subr.mxu0 0.0
    %561 = vmatpush1.msra.mxu0 0.0
    %562 = vmatprep.subr.mxu0 0.0
    %563 = vmatpush1.msra.mxu0 0.0
    %564 = vmatprep.subr.mxu0 0.0
    %565 = vmatpush1.msra.mxu0 0.0
    %566 = vmatprep.subr.mxu0 0.0
    %567 = vmatpush1.msra.mxu0 0.0
    %568 = vmatprep.subr.mxu0 0.0
    %569 = vmatpush1.msra.mxu0 0.0
    %570 = vmatprep.subr.mxu0 0.0
    %571 = vmatpush1.msra.mxu0 0.0
    %572 = vmatprep.subr.mxu0 0.0
    %573 = vmatpush1.msra.mxu0 0.0
    %574 = vmatprep.subr.mxu0 0.0
    %575 = vmatpush1.msra.mxu0 0.0
    %576 = vmatprep.subr.mxu0 0.0
    %577 = vmatpush1.msra.mxu0 0.0
    %578 = vmatprep.subr.mxu0 0.0
    %579 = vmatpush1.msra.mxu0 0.0
    %580 = vmatprep.subr.mxu0 0.0
    %581 = vmatpush1.msra.mxu0 0.0
    %582 = vmatprep.subr.mxu0 0.0
    %583 = vmatpush1.msra.mxu0 0.0
    %584 = vmatprep.subr.mxu0 0.0
    %585 = vmatpush1.msra.mxu0 0.0
    %586 = vmatprep.subr.mxu0 0.0
    %587 = vmatpush1.msra.mxu0 0.0
    %588 = vmatprep.subr.mxu0 0.0
    %589 = vmatpush1.msra.mxu0 0.0
    %590 = vmatprep.subr.mxu0 0.0
    %591 = vmatpush1.msra.mxu0 0.0
    %592 = vmatprep.subr.mxu0 0.0
    %593 = vmatpush1.msra.mxu0 0.0
    %594 = vmatprep.subr.mxu0 0.0
    %595 = vmatpush1.msra.mxu0 0.0
    %596 = vmatprep.subr.mxu0 0.0
    %597 = vmatpush1.msra.mxu0 0.0
    %598 = vmatprep.subr.mxu0 0.0
    %599 = vmatpush1.msra.mxu0 0.0
    %600 = vmatprep.mubr.f32.mxu0 0.0
    %601 = vmatmul.mubr.f32.gmra.mrb[0].mxu0 %v534
    %v602 = vpop.f32.mrb[0].mxu0
    %v603 = vadd.f32 0.0, %v602
    %v604 = vpop.f32.mrb[0].mxu0
    %605 = vdwg.mxu0
    %v607 = vsel %vm532, %v531, 0
    %609 = vmatprep.subr.mxu0 0.0
    %610 = vmatpush1.msra.mxu0 %v41
    %611 = vmatprep.subr.mxu0 0.0
    %612 = vmatpush1.msra.mxu0 0.0
    %613 = vmatprep.subr.mxu0 0.0
    %614 = vmatpush1.msra.mxu0 0.0
    %615 = vmatprep.subr.mxu0 0.0
    %616 = vmatpush1.msra.mxu0 0.0
    %617 = vmatprep.subr.mxu0 0.0
    %618 = vmatpush1.msra.mxu0 0.0
    %619 = vmatprep.subr.mxu0 0.0
    %620 = vmatpush1.msra.mxu0 0.0
    %621 = vmatprep.subr.mxu0 0.0
    %622 = vmatpush1.msra.mxu0 0.0
    %623 = vmatprep.subr.mxu0 0.0
    %624 = vmatpush1.msra.mxu0 0.0
    %625 = vmatprep.subr.mxu0 0.0
    %626 = vmatpush1.msra.mxu0 0.0
    %627 = vmatprep.subr.mxu0 0.0
    %628 = vmatpush1.msra.mxu0 0.0
    %629 = vmatprep.subr.mxu0 0.0
    %630 = vmatpush1.msra.mxu0 0.0
    %631 = vmatprep.subr.mxu0 0.0
    %632 = vmatpush1.msra.mxu0 0.0
    %633 = vmatprep.subr.mxu0 0.0
    %634 = vmatpush1.msra.mxu0 0.0
    %635 = vmatprep.subr.mxu0 0.0
    %636 = vmatpush1.msra.mxu0 0.0
    %637 = vmatprep.subr.mxu0 0.0
    %638 = vmatpush1.msra.mxu0 0.0
    %639 = vmatprep.subr.mxu0 0.0
    %640 = vmatpush1.msra.mxu0 0.0
    %641 = vmatprep.subr.mxu0 0.0
    %642 = vmatpush1.msra.mxu0 0.0
    %643 = vmatprep.subr.mxu0 0.0
    %644 = vmatpush1.msra.mxu0 0.0
    %645 = vmatprep.subr.mxu0 0.0
    %646 = vmatpush1.msra.mxu0 0.0
    %647 = vmatprep.subr.mxu0 0.0
    %648 = vmatpush1.msra.mxu0 0.0
    %649 = vmatprep.subr.mxu0 0.0
    %650 = vmatpush1.msra.mxu0 0.0
    %651 = vmatprep.subr.mxu0 0.0
    %652 = vmatpush1.msra.mxu0 0.0
    %653 = vmatprep.subr.mxu0 0.0
    %654 = vmatpush1.msra.mxu0 0.0
    %655 = vmatprep.subr.mxu0 0.0
    %656 = vmatpush1.msra.mxu0 0.0
    %657 = vmatprep.subr.mxu0 0.0
    %658 = vmatpush1.msra.mxu0 0.0
    %659 = vmatprep.subr.mxu0 0.0
    %660 = vmatpush1.msra.mxu0 0.0
    %661 = vmatprep.subr.mxu0 0.0
    %662 = vmatpush1.msra.mxu0 0.0
    %663 = vmatprep.subr.mxu0 0.0
    %664 = vmatpush1.msra.mxu0 0.0
    %665 = vmatprep.subr.mxu0 0.0
    %666 = vmatpush1.msra.mxu0 0.0
    %667 = vmatprep.subr.mxu0 0.0
    %668 = vmatpush1.msra.mxu0 0.0
    %669 = vmatprep.subr.mxu0 0.0
    %670 = vmatpush1.msra.mxu0 0.0
    %671 = vmatprep.subr.mxu0 0.0
    %672 = vmatpush1.msra.mxu0 0.0
    %673 = vmatprep.mubr.f32.mxu0 0.0
    %674 = vmatmul.mubr.f32.gmra.mrb[0].mxu0 %v607
    %v675 = vpop.f32.mrb[0].mxu0
    %v676 = vadd.f32 0.0, %v675
    %v677 = vpop.f32.mrb[0].mxu0
    %678 = vdwg.mxu0
    %v679 = vlaneseq
    %v680 = vshrl.u32 %v679, 7
    %v681 = vsub.s32 0, %v680
    %v682 = vrot.slane %v603, %v681
    %v683 = vsub.f32 %v224, %v682
    %v684 = vsub.f32 %v229, %v682
    %v685 = vlaneseq
    %v686 = vshrl.u32 %v685, 7
    %v687 = vsub.s32 0, %v686
    %v688 = vrot.slane %v676, %v687
    %v689 = vmul.f32 %v683, %v688
    %v690 = vmul.f32 %v684, %v688
    %691 = vst.msk [vmem:[#allocation2] sm:$0xff] %vm378, %v689
    %692 = vst.msk [vmem:[#allocation2 + $0x8] sm:$0xff] %vm378, %v690
    %v693 = vld [vmem:[%s4] sm:$0xff]
    %v694 = vld [vmem:[%s4 + $0x8] sm:$0xff]
    %v695 = vmax.f32 %v693, 0.0
    %v696 = vmax.f32 %v694, 0.0
    %v697 = vld [vmem:[%s5] sm:$0xff]
    %v698 = vld [vmem:[%s5 + $0x8] sm:$0xff]
    %v699 = vld [vmem:[%s5 + $0x10] sm:$0xff]
    %v700 = vld [vmem:[%s5 + $0x18] sm:$0xff]
    %v701 = vld [vmem:[%s5 + $0x20] sm:$0xff]
    %v702 = vld [vmem:[%s5 + $0x28] sm:$0xff]
    %v703 = vld [vmem:[%s5 + $0x30] sm:$0xff]
    %v704 = vld [vmem:[%s5 + $0x38] sm:$0xff]
    %v706 = vsel %vm378, %v695, 0
    %v709 = vsel %vm378, %v696, 0
    %711 = vmatprep.subr.mxu0 0.0
    %712 = vmatpush1.msra.mxu0 %v697
    %713 = vmatprep.subr.mxu0 0.0
    %714 = vmatpush1.msra.mxu0 %v698
    %715 = vmatprep.subr.mxu0 0.0
    %716 = vmatpush1.msra.mxu0 %v699
    %717 = vmatprep.subr.mxu0 0.0
    %718 = vmatpush1.msra.mxu0 %v700
    %719 = vmatprep.subr.mxu0 0.0
    %720 = vmatpush1.msra.mxu0 %v701
    %721 = vmatprep.subr.mxu0 0.0
    %722 = vmatpush1.msra.mxu0 %v702
    %723 = vmatprep.subr.mxu0 0.0
    %724 = vmatpush1.msra.mxu0 %v703
    %725 = vmatprep.subr.mxu0 0.0
    %726 = vmatpush1.msra.mxu0 %v704
    %727 = vmatprep.subr.mxu0 0.0
    %728 = vmatpush1.msra.mxu0 0.0
    %729 = vmatprep.subr.mxu0 0.0
    %730 = vmatpush1.msra.mxu0 0.0
    %731 = vmatprep.subr.mxu0 0.0
    %732 = vmatpush1.msra.mxu0 0.0
    %733 = vmatprep.subr.mxu0 0.0
    %734 = vmatpush1.msra.mxu0 0.0
    %735 = vmatprep.subr.mxu0 0.0
    %736 = vmatpush1.msra.mxu0 0.0
    %737 = vmatprep.subr.mxu0 0.0
    %738 = vmatpush1.msra.mxu0 0.0
    %739 = vmatprep.subr.mxu0 0.0
    %740 = vmatpush1.msra.mxu0 0.0
    %741 = vmatprep.subr.mxu0 0.0
    %742 = vmatpush1.msra.mxu0 0.0
    %743 = vmatprep.subr.mxu0 0.0
    %744 = vmatpush1.msra.mxu0 0.0
    %745 = vmatprep.subr.mxu0 0.0
    %746 = vmatpush1.msra.mxu0 0.0
    %747 = vmatprep.subr.mxu0 0.0
    %748 = vmatpush1.msra.mxu0 0.0
    %749 = vmatprep.subr.mxu0 0.0
    %750 = vmatpush1.msra.mxu0 0.0
    %751 = vmatprep.subr.mxu0 0.0
    %752 = vmatpush1.msra.mxu0 0.0
    %753 = vmatprep.subr.mxu0 0.0
    %754 = vmatpush1.msra.mxu0 0.0
    %755 = vmatprep.subr.mxu0 0.0
    %756 = vmatpush1.msra.mxu0 0.0
    %757 = vmatprep.subr.mxu0 0.0
    %758 = vmatpush1.msra.mxu0 0.0
    %759 = vmatprep.subr.mxu0 0.0
    %760 = vmatpush1.msra.mxu0 0.0
    %761 = vmatprep.subr.mxu0 0.0
    %762 = vmatpush1.msra.mxu0 0.0
    %763 = vmatprep.subr.mxu0 0.0
    %764 = vmatpush1.msra.mxu0 0.0
    %765 = vmatprep.subr.mxu0 0.0
    %766 = vmatpush1.msra.mxu0 0.0
    %767 = vmatprep.subr.mxu0 0.0
    %768 = vmatpush1.msra.mxu0 0.0
    %769 = vmatprep.subr.mxu0 0.0
    %770 = vmatpush1.msra.mxu0 0.0
    %771 = vmatprep.subr.mxu0 0.0
    %772 = vmatpush1.msra.mxu0 0.0
    %773 = vmatprep.subr.mxu0 0.0
    %774 = vmatpush1.msra.mxu0 0.0
    %775 = vmatprep.mubr.f32.mxu0 0.0
    %776 = vmatmul.mubr.f32.gmra.mrb[0].mxu0 %v706
    %v777 = vpop.f32.mrb[0].mxu0
    %v778 = vadd.f32 0.0, %v777
    %v779 = vpop.f32.mrb[0].mxu0
    %780 = vmatprep.mubr.f32.mxu0 0.0
    %781 = vmatmul.mubr.f32.gmra.mrb[0].mxu0 %v709
    %v782 = vpop.f32.mrb[0].mxu0
    %v783 = vadd.f32 0.0, %v782
    %v784 = vpop.f32.mrb[0].mxu0
    %785 = vdwg.mxu0
    %786 = vmatprep.subr.mxu0 0.0
    %787 = vmatpush1.msra.mxu0 %v778
    %788 = vmatprep.subr.mxu0 0.0
    %789 = vmatpush1.msra.mxu0 %v783
    %790 = vmatprep.subr.mxu0 0.0
    %791 = vmatpush1.msra.mxu0 0.0
    %792 = vmatprep.subr.mxu0 0.0
    %793 = vmatpush1.msra.mxu0 0.0
    %794 = vmatprep.subr.mxu0 0.0
    %795 = vmatpush1.msra.mxu0 0.0
    %796 = vmatprep.subr.mxu0 0.0
    %797 = vmatpush1.msra.mxu0 0.0
    %798 = vmatprep.subr.mxu0 0.0
    %799 = vmatpush1.msra.mxu0 0.0
    %800 = vmatprep.subr.mxu0 0.0
    %801 = vmatpush1.msra.mxu0 0.0
    %802 = vmatprep.subr.mxu0 0.0
    %803 = vmatpush1.msra.mxu0 0.0
    %804 = vmatprep.subr.mxu0 0.0
    %805 = vmatpush1.msra.mxu0 0.0
    %806 = vmatprep.subr.mxu0 0.0
    %807 = vmatpush1.msra.mxu0 0.0
    %808 = vmatprep.subr.mxu0 0.0
    %809 = vmatpush1.msra.mxu0 0.0
    %810 = vmatprep.subr.mxu0 0.0
    %811 = vmatpush1.msra.mxu0 0.0
    %812 = vmatprep.subr.mxu0 0.0
    %813 = vmatpush1.msra.mxu0 0.0
    %814 = vmatprep.subr.mxu0 0.0
    %815 = vmatpush1.msra.mxu0 0.0
    %816 = vmatprep.subr.mxu0 0.0
    %817 = vmatpush1.msra.mxu0 0.0
    %818 = vmatprep.subr.mxu0 0.0
    %819 = vmatpush1.msra.mxu0 0.0
    %820 = vmatprep.subr.mxu0 0.0
    %821 = vmatpush1.msra.mxu0 0.0
    %822 = vmatprep.subr.mxu0 0.0
    %823 = vmatpush1.msra.mxu0 0.0
    %824 = vmatprep.subr.mxu0 0.0
    %825 = vmatpush1.msra.mxu0 0.0
    %826 = vmatprep.subr.mxu0 0.0
    %827 = vmatpush1.msra.mxu0 0.0
    %828 = vmatprep.subr.mxu0 0.0
    %829 = vmatpush1.msra.mxu0 0.0
    %830 = vmatprep.subr.mxu0 0.0
    %831 = vmatpush1.msra.mxu0 0.0
    %832 = vmatprep.subr.mxu0 0.0
    %833 = vmatpush1.msra.mxu0 0.0
    %834 = vmatprep.subr.mxu0 0.0
    %835 = vmatpush1.msra.mxu0 0.0
    %836 = vmatprep.subr.mxu0 0.0
    %837 = vmatpush1.msra.mxu0 0.0
    %838 = vmatprep.subr.mxu0 0.0
    %839 = vmatpush1.msra.mxu0 0.0
    %840 = vmatprep.subr.mxu0 0.0
    %841 = vmatpush1.msra.mxu0 0.0
    %842 = vmatprep.subr.mxu0 0.0
    %843 = vmatpush1.msra.mxu0 0.0
    %844 = vmatprep.subr.mxu0 0.0
    %845 = vmatpush1.msra.mxu0 0.0
    %846 = vmatprep.subr.mxu0 0.0
    %847 = vmatpush1.msra.mxu0 0.0
    %848 = vmatprep.subr.mxu0 0.0
    %849 = vmatpush1.msra.mxu0 0.0
    %850 = vmatprep.mubr.f32.mxu0 0.0
    %851 = vmatmul.mubr.f32.gmra.mrb[0].mxu0 %v234
    %v852 = vpop.f32.mrb[0].mxu0
    %v853 = vadd.f32 0.0, %v852
    %v854 = vpop.f32.mrb[0].mxu0
    %855 = vdwg.mxu0
    %v856 = vmul.f32 %v778, %v778
    %v857 = vmul.f32 %v783, %v783
    %858 = vmatprep.subr.mxu0 0.0
    %859 = vmatpush1.msra.mxu0 %v856
    %860 = vmatprep.subr.mxu0 0.0
    %861 = vmatpush1.msra.mxu0 %v857
    %862 = vmatprep.subr.mxu0 0.0
    %863 = vmatpush1.msra.mxu0 0.0
    %864 = vmatprep.subr.mxu0 0.0
    %865 = vmatpush1.msra.mxu0 0.0
    %866 = vmatprep.subr.mxu0 0.0
    %867 = vmatpush1.msra.mxu0 0.0
    %868 = vmatprep.subr.mxu0 0.0
    %869 = vmatpush1.msra.mxu0 0.0
    %870 = vmatprep.subr.mxu0 0.0
    %871 = vmatpush1.msra.mxu0 0.0
    %872 = vmatprep.subr.mxu0 0.0
    %873 = vmatpush1.msra.mxu0 0.0
    %874 = vmatprep.subr.mxu0 0.0
    %875 = vmatpush1.msra.mxu0 0.0
    %876 = vmatprep.subr.mxu0 0.0
    %877 = vmatpush1.msra.mxu0 0.0
    %878 = vmatprep.subr.mxu0 0.0
    %879 = vmatpush1.msra.mxu0 0.0
    %880 = vmatprep.subr.mxu0 0.0
    %881 = vmatpush1.msra.mxu0 0.0
    %882 = vmatprep.subr.mxu0 0.0
    %883 = vmatpush1.msra.mxu0 0.0
    %884 = vmatprep.subr.mxu0 0.0
    %885 = vmatpush1.msra.mxu0 0.0
    %886 = vmatprep.subr.mxu0 0.0
    %887 = vmatpush1.msra.mxu0 0.0
    %888 = vmatprep.subr.mxu0 0.0
    %889 = vmatpush1.msra.mxu0 0.0
    %890 = vmatprep.subr.mxu0 0.0
    %891 = vmatpush1.msra.mxu0 0.0
    %892 = vmatprep.subr.mxu0 0.0
    %893 = vmatpush1.msra.mxu0 0.0
    %894 = vmatprep.subr.mxu0 0.0
    %895 = vmatpush1.msra.mxu0 0.0
    %896 = vmatprep.subr.mxu0 0.0
    %897 = vmatpush1.msra.mxu0 0.0
    %898 = vmatprep.subr.mxu0 0.0
    %899 = vmatpush1.msra.mxu0 0.0
    %900 = vmatprep.subr.mxu0 0.0
    %901 = vmatpush1.msra.mxu0 0.0
    %902 = vmatprep.subr.mxu0 0.0
    %903 = vmatpush1.msra.mxu0 0.0
    %904 = vmatprep.subr.mxu0 0.0
    %905 = vmatpush1.msra.mxu0 0.0
    %906 = vmatprep.subr.mxu0 0.0
    %907 = vmatpush1.msra.mxu0 0.0
    %908 = vmatprep.subr.mxu0 0.0
    %909 = vmatpush1.msra.mxu0 0.0
    %910 = vmatprep.subr.mxu0 0.0
    %911 = vmatpush1.msra.mxu0 0.0
    %912 = vmatprep.subr.mxu0 0.0
    %913 = vmatpush1.msra.mxu0 0.0
    %914 = vmatprep.subr.mxu0 0.0
    %915 = vmatpush1.msra.mxu0 0.0
    %916 = vmatprep.subr.mxu0 0.0
    %917 = vmatpush1.msra.mxu0 0.0
    %918 = vmatprep.subr.mxu0 0.0
    %919 = vmatpush1.msra.mxu0 0.0
    %920 = vmatprep.subr.mxu0 0.0
    %921 = vmatpush1.msra.mxu0 0.0
    %922 = vmatprep.mubr.f32.mxu0 0.0
    %923 = vmatmul.mubr.f32.gmra.mrb[0].mxu0 %v234
    %v924 = vpop.f32.mrb[0].mxu0
    %v925 = vadd.f32 0.0, %v924
    %v926 = vpop.f32.mrb[0].mxu0
    %927 = vdwg.mxu0
    %v929 = vsel %vm378, %v853, 0
    %931 = vmatprep.subr.mxu0 0.0
    %932 = vmatpush1.msra.mxu0 %v33
    %933 = vmatprep.subr.mxu0 0.0
    %934 = vmatpush1.msra.mxu0 %v34
    %935 = vmatprep.subr.mxu0 0.0
    %936 = vmatpush1.msra.mxu0 %v35
    %937 = vmatprep.subr.mxu0 0.0
    %938 = vmatpush1.msra.mxu0 %v36
    %939 = vmatprep.subr.mxu0 0.0
    %940 = vmatpush1.msra.mxu0 %v37
    %941 = vmatprep.subr.mxu0 0.0
    %942 = vmatpush1.msra.mxu0 %v38
    %943 = vmatprep.subr.mxu0 0.0
    %944 = vmatpush1.msra.mxu0 %v39
    %945 = vmatprep.subr.mxu0 0.0
    %946 = vmatpush1.msra.mxu0 %v40
    %947 = vmatprep.subr.mxu0 0.0
    %948 = vmatpush1.msra.mxu0 0.0
    %949 = vmatprep.subr.mxu0 0.0
    %950 = vmatpush1.msra.mxu0 0.0
    %951 = vmatprep.subr.mxu0 0.0
    %952 = vmatpush1.msra.mxu0 0.0
    %953 = vmatprep.subr.mxu0 0.0
    %954 = vmatpush1.msra.mxu0 0.0
    %955 = vmatprep.subr.mxu0 0.0
    %956 = vmatpush1.msra.mxu0 0.0
    %957 = vmatprep.subr.mxu0 0.0
    %958 = vmatpush1.msra.mxu0 0.0
    %959 = vmatprep.subr.mxu0 0.0
    %960 = vmatpush1.msra.mxu0 0.0
    %961 = vmatprep.subr.mxu0 0.0
    %962 = vmatpush1.msra.mxu0 0.0
    %963 = vmatprep.subr.mxu0 0.0
    %964 = vmatpush1.msra.mxu0 0.0
    %965 = vmatprep.subr.mxu0 0.0
    %966 = vmatpush1.msra.mxu0 0.0
    %967 = vmatprep.subr.mxu0 0.0
    %968 = vmatpush1.msra.mxu0 0.0
    %969 = vmatprep.subr.mxu0 0.0
    %970 = vmatpush1.msra.mxu0 0.0
    %971 = vmatprep.subr.mxu0 0.0
    %972 = vmatpush1.msra.mxu0 0.0
    %973 = vmatprep.subr.mxu0 0.0
    %974 = vmatpush1.msra.mxu0 0.0
    %975 = vmatprep.subr.mxu0 0.0
    %976 = vmatpush1.msra.mxu0 0.0
    %977 = vmatprep.subr.mxu0 0.0
    %978 = vmatpush1.msra.mxu0 0.0
    %979 = vmatprep.subr.mxu0 0.0
    %980 = vmatpush1.msra.mxu0 0.0
    %981 = vmatprep.subr.mxu0 0.0
    %982 = vmatpush1.msra.mxu0 0.0
    %983 = vmatprep.subr.mxu0 0.0
    %984 = vmatpush1.msra.mxu0 0.0
    %985 = vmatprep.subr.mxu0 0.0
    %986 = vmatpush1.msra.mxu0 0.0
    %987 = vmatprep.subr.mxu0 0.0
    %988 = vmatpush1.msra.mxu0 0.0
    %989 = vmatprep.subr.mxu0 0.0
    %990 = vmatpush1.msra.mxu0 0.0
    %991 = vmatprep.subr.mxu0 0.0
    %992 = vmatpush1.msra.mxu0 0.0
    %993 = vmatprep.subr.mxu0 0.0
    %994 = vmatpush1.msra.mxu0 0.0
    %995 = vmatprep.mubr.f32.mxu0 0.0
    %996 = vmatmul.mubr.f32.gmra.mrb[0].mxu0 %v929
    %v997 = vpop.f32.mrb[0].mxu0
    %v998 = vadd.f32 0.0, %v997
    %v999 = vpop.f32.mrb[0].mxu0
    %1000 = vdwg.mxu0
    %v1001 = vmul.f32 %v998, 0.0078125
    %v1003 = vsel %vm378, %v925, 0
    %1005 = vmatprep.subr.mxu0 0.0
    %1006 = vmatpush1.msra.mxu0 %v33
    %1007 = vmatprep.subr.mxu0 0.0
    %1008 = vmatpush1.msra.mxu0 %v34
    %1009 = vmatprep.subr.mxu0 0.0
    %1010 = vmatpush1.msra.mxu0 %v35
    %1011 = vmatprep.subr.mxu0 0.0
    %1012 = vmatpush1.msra.mxu0 %v36
    %1013 = vmatprep.subr.mxu0 0.0
    %1014 = vmatpush1.msra.mxu0 %v37
    %1015 = vmatprep.subr.mxu0 0.0
    %1016 = vmatpush1.msra.mxu0 %v38
    %1017 = vmatprep.subr.mxu0 0.0
    %1018 = vmatpush1.msra.mxu0 %v39
    %1019 = vmatprep.subr.mxu0 0.0
    %1020 = vmatpush1.msra.mxu0 %v40
    %1021 = vmatprep.subr.mxu0 0.0
    %1022 = vmatpush1.msra.mxu0 0.0
    %1023 = vmatprep.subr.mxu0 0.0
    %1024 = vmatpush1.msra.mxu0 0.0
    %1025 = vmatprep.subr.mxu0 0.0
    %1026 = vmatpush1.msra.mxu0 0.0
    %1027 = vmatprep.subr.mxu0 0.0
    %1028 = vmatpush1.msra.mxu0 0.0
    %1029 = vmatprep.subr.mxu0 0.0
    %1030 = vmatpush1.msra.mxu0 0.0
    %1031 = vmatprep.subr.mxu0 0.0
    %1032 = vmatpush1.msra.mxu0 0.0
    %1033 = vmatprep.subr.mxu0 0.0
    %1034 = vmatpush1.msra.mxu0 0.0
    %1035 = vmatprep.subr.mxu0 0.0
    %1036 = vmatpush1.msra.mxu0 0.0
    %1037 = vmatprep.subr.mxu0 0.0
    %1038 = vmatpush1.msra.mxu0 0.0
    %1039 = vmatprep.subr.mxu0 0.0
    %1040 = vmatpush1.msra.mxu0 0.0
    %1041 = vmatprep.subr.mxu0 0.0
    %1042 = vmatpush1.msra.mxu0 0.0
    %1043 = vmatprep.subr.mxu0 0.0
    %1044 = vmatpush1.msra.mxu0 0.0
    %1045 = vmatprep.subr.mxu0 0.0
    %1046 = vmatpush1.msra.mxu0 0.0
    %1047 = vmatprep.subr.mxu0 0.0
    %1048 = vmatpush1.msra.mxu0 0.0
    %1049 = vmatprep.subr.mxu0 0.0
    %1050 = vmatpush1.msra.mxu0 0.0
    %1051 = vmatprep.subr.mxu0 0.0
    %1052 = vmatpush1.msra.mxu0 0.0
    %1053 = vmatprep.subr.mxu0 0.0
    %1054 = vmatpush1.msra.mxu0 0.0
    %1055 = vmatprep.subr.mxu0 0.0
    %1056 = vmatpush1.msra.mxu0 0.0
    %1057 = vmatprep.subr.mxu0 0.0
    %1058 = vmatpush1.msra.mxu0 0.0
    %1059 = vmatprep.subr.mxu0 0.0
    %1060 = vmatpush1.msra.mxu0 0.0
    %1061 = vmatprep.subr.mxu0 0.0
    %1062 = vmatpush1.msra.mxu0 0.0
    %1063 = vmatprep.subr.mxu0 0.0
    %1064 = vmatpush1.msra.mxu0 0.0
    %1065 = vmatprep.subr.mxu0 0.0
    %1066 = vmatpush1.msra.mxu0 0.0
    %1067 = vmatprep.subr.mxu0 0.0
    %1068 = vmatpush1.msra.mxu0 0.0
    %1069 = vmatprep.mubr.f32.mxu0 0.0
    %1070 = vmatmul.mubr.f32.gmra.mrb[0].mxu0 %v1003
    %v1071 = vpop.f32.mrb[0].mxu0
    %v1072 = vadd.f32 0.0, %v1071
    %v1073 = vpop.f32.mrb[0].mxu0
    %1074 = vdwg.mxu0
    %v1075 = vmul.f32 %v1072, 0.0078125
    %v1076 = vmul.f32 %v1001, %v1001
    %v1077 = vsub.f32 %v1075, %v1076
    %v1078 = vmax.f32 %v1077, 0.0
    %v1079 = vadd.f32 %v1078, 1e-05
    %v1080 = vrsqrt.pop %v1079
    %v1082 = vsel %vm532, %v1001, 0
    %1084 = vmatprep.subr.mxu0 0.0
    %1085 = vmatpush1.msra.mxu0 %v41
    %1086 = vmatprep.subr.mxu0 0.0
    %1087 = vmatpush1.msra.mxu0 0.0
    %1088 = vmatprep.subr.mxu0 0.0
    %1089 = vmatpush1.msra.mxu0 0.0
    %1090 = vmatprep.subr.mxu0 0.0
    %1091 = vmatpush1.msra.mxu0 0.0
    %1092 = vmatprep.subr.mxu0 0.0
    %1093 = vmatpush1.msra.mxu0 0.0
    %1094 = vmatprep.subr.mxu0 0.0
    %1095 = vmatpush1.msra.mxu0 0.0
    %1096 = vmatprep.subr.mxu0 0.0
    %1097 = vmatpush1.msra.mxu0 0.0
    %1098 = vmatprep.subr.mxu0 0.0
    %1099 = vmatpush1.msra.mxu0 0.0
    %1100 = vmatprep.subr.mxu0 0.0
    %1101 = vmatpush1.msra.mxu0 0.0
    %1102 = vmatprep.subr.mxu0 0.0
    %1103 = vmatpush1.msra.mxu0 0.0
    %1104 = vmatprep.subr.mxu0 0.0
    %1105 = vmatpush1.msra.mxu0 0.0
    %1106 = vmatprep.subr.mxu0 0.0
    %1107 = vmatpush1.msra.mxu0 0.0
    %1108 = vmatprep.subr.mxu0 0.0
    %1109 = vmatpush1.msra.mxu0 0.0
    %1110 = vmatprep.subr.mxu0 0.0
    %1111 = vmatpush1.msra.mxu0 0.0
    %1112 = vmatprep.subr.mxu0 0.0
    %1113 = vmatpush1.msra.mxu0 0.0
    %1114 = vmatprep.subr.mxu0 0.0
    %1115 = vmatpush1.msra.mxu0 0.0
    %1116 = vmatprep.subr.mxu0 0.0
    %1117 = vmatpush1.msra.mxu0 0.0
    %1118 = vmatprep.subr.mxu0 0.0
    %1119 = vmatpush1.msra.mxu0 0.0
    %1120 = vmatprep.subr.mxu0 0.0
    %1121 = vmatpush1.msra.mxu0 0.0
    %1122 = vmatprep.subr.mxu0 0.0
    %1123 = vmatpush1.msra.mxu0 0.0
    %1124 = vmatprep.subr.mxu0 0.0
    %1125 = vmatpush1.msra.mxu0 0.0
    %1126 = vmatprep.subr.mxu0 0.0
    %1127 = vmatpush1.msra.mxu0 0.0
    %1128 = vmatprep.subr.mxu0 0.0
    %1129 = vmatpush1.msra.mxu0 0.0
    %1130 = vmatprep.subr.mxu0 0.0
    %1131 = vmatpush1.msra.mxu0 0.0
    %1132 = vmatprep.subr.mxu0 0.0
    %1133 = vmatpush1.msra.mxu0 0.0
    %1134 = vmatprep.subr.mxu0 0.0
    %1135 = vmatpush1.msra.mxu0 0.0
    %1136 = vmatprep.subr.mxu0 0.0
    %1137 = vmatpush1.msra.mxu0 0.0
    %1138 = vmatprep.subr.mxu0 0.0
    %1139 = vmatpush1.msra.mxu0 0.0
    %1140 = vmatprep.subr.mxu0 0.0
    %1141 = vmatpush1.msra.mxu0 0.0
    %1142 = vmatprep.subr.mxu0 0.0
    %1143 = vmatpush1.msra.mxu0 0.0
    %1144 = vmatprep.subr.mxu0 0.0
    %1145 = vmatpush1.msra.mxu0 0.0
    %1146 = vmatprep.subr.mxu0 0.0
    %1147 = vmatpush1.msra.mxu0 0.0
    %1148 = vmatprep.mubr.f32.mxu0 0.0
    %1149 = vmatmul.mubr.f32.gmra.mrb[0].mxu0 %v1082
    %v1150 = vpop.f32.mrb[0].mxu0
    %v1151 = vadd.f32 0.0, %v1150
    %v1152 = vpop.f32.mrb[0].mxu0
    %1153 = vdwg.mxu0
    %v1155 = vsel %vm532, %v1080, 0
    %1157 = vmatprep.subr.mxu0 0.0
    %1158 = vmatpush1.msra.mxu0 %v41
    %1159 = vmatprep.subr.mxu0 0.0
    %1160 = vmatpush1.msra.mxu0 0.0
    %1161 = vmatprep.subr.mxu0 0.0
    %1162 = vmatpush1.msra.mxu0 0.0
    %1163 = vmatprep.subr.mxu0 0.0
    %1164 = vmatpush1.msra.mxu0 0.0
    %1165 = vmatprep.subr.mxu0 0.0
    %1166 = vmatpush1.msra.mxu0 0.0
    %1167 = vmatprep.subr.mxu0 0.0
    %1168 = vmatpush1.msra.mxu0 0.0
    %1169 = vmatprep.subr.mxu0 0.0
    %1170 = vmatpush1.msra.mxu0 0.0
    %1171 = vmatprep.subr.mxu0 0.0
    %1172 = vmatpush1.msra.mxu0 0.0
    %1173 = vmatprep.subr.mxu0 0.0
    %1174 = vmatpush1.msra.mxu0 0.0
    %1175 = vmatprep.subr.mxu0 0.0
    %1176 = vmatpush1.msra.mxu0 0.0
    %1177 = vmatprep.subr.mxu0 0.0
    %1178 = vmatpush1.msra.mxu0 0.0
    %1179 = vmatprep.subr.mxu0 0.0
    %1180 = vmatpush1.msra.mxu0 0.0
    %1181 = vmatprep.subr.mxu0 0.0
    %1182 = vmatpush1.msra.mxu0 0.0
    %1183 = vmatprep.subr.mxu0 0.0
    %1184 = vmatpush1.msra.mxu0 0.0
    %1185 = vmatprep.subr.mxu0 0.0
    %1186 = vmatpush1.msra.mxu0 0.0
    %1187 = vmatprep.subr.mxu0 0.0
    %1188 = vmatpush1.msra.mxu0 0.0
    %1189 = vmatprep.subr.mxu0 0.0
    %1190 = vmatpush1.msra.mxu0 0.0
    %1191 = vmatprep.subr.mxu0 0.0
    %1192 = vmatpush1.msra.mxu0 0.0
    %1193 = vmatprep.subr.mxu0 0.0
    %1194 = vmatpush1.msra.mxu0 0.0
    %1195 = vmatprep.subr.mxu0 0.0
    %1196 = vmatpush1.msra.mxu0 0.0
    %1197 = vmatprep.subr.mxu0 0.0
    %1198 = vmatpush1.msra.mxu0 0.0
    %1199 = vmatprep.subr.mxu0 0.0
    %1200 = vmatpush1.msra.mxu0 0.0
    %1201 = vmatprep.subr.mxu0 0.0
    %1202 = vmatpush1.msra.mxu0 0.0
    %1203 = vmatprep.subr.mxu0 0.0
    %1204 = vmatpush1.msra.mxu0 0.0
    %1205 = vmatprep.subr.mxu0 0.0
    %1206 = vmatpush1.msra.mxu0 0.0
    %1207 = vmatprep.subr.mxu0 0.0
    %1208 = vmatpush1.msra.mxu0 0.0
    %1209 = vmatprep.subr.mxu0 0.0
    %1210 = vmatpush1.msra.mxu0 0.0
    %1211 = vmatprep.subr.mxu0 0.0
    %1212 = vmatpush1.msra.mxu0 0.0
    %1213 = vmatprep.subr.mxu0 0.0
    %1214 = vmatpush1.msra.mxu0 0.0
    %1215 = vmatprep.subr.mxu0 0.0
    %1216 = vmatpush1.msra.mxu0 0.0
    %1217 = vmatprep.subr.mxu0 0.0
    %1218 = vmatpush1.msra.mxu0 0.0
    %1219 = vmatprep.subr.mxu0 0.0
    %1220 = vmatpush1.msra.mxu0 0.0
    %1221 = vmatprep.mubr.f32.mxu0 0.0
    %1222 = vmatmul.mubr.f32.gmra.mrb[0].mxu0 %v1155
    %v1223 = vpop.f32.mrb[0].mxu0
    %v1224 = vadd.f32 0.0, %v1223
    %v1225 = vpop.f32.mrb[0].mxu0
    %1226 = vdwg.mxu0
    %v1227 = vlaneseq
    %v1228 = vshrl.u32 %v1227, 7
    %v1229 = vsub.s32 0, %v1228
    %v1230 = vrot.slane %v1151, %v1229
    %v1231 = vsub.f32 %v778, %v1230
    %v1232 = vsub.f32 %v783, %v1230
    %v1233 = vlaneseq
    %v1234 = vshrl.u32 %v1233, 7
    %v1235 = vsub.s32 0, %v1234
    %v1236 = vrot.slane %v1224, %v1235
    %v1237 = vmul.f32 %v1231, %v1236
    %v1238 = vmul.f32 %v1232, %v1236
    %1239 = vst.msk [vmem:[#allocation4] sm:$0xff] %vm378, %v1237
    %1240 = vst.msk [vmem:[#allocation4 + $0x8] sm:$0xff] %vm378, %v1238
    // Predicated region
    $region34: #{tpu_custom_call.1} parent=1 // pred_check
      _
    $region35: #{tpu_custom_call.1} parent=1 // pred_check_branch
      %1242 = sbr.rel (0) target = $region37
    $region36: #{tpu_custom_call.1} parent=1 // pred_region
      %s1244 = ssub.s32 256, 256
      %1245 = vsyncadd [#allocation3], %s1244
      %s1246 = sshll.u32 [#allocation2], 4
      %s1247 = int_to_ptr.vmem [resolvable:$true] %s1246
      %1252 = dma.vmem_to_hbm [thread:$0]  %s1247, 256, %s8, [#allocation3], 128, 128, 8
    $region37: #{tpu_custom_call.1} parent=1 // pred_fallthru
      _
    // Predicated region
    $region38: #{tpu_custom_call.1} parent=1 // pred_check
      _
    $region39: #{tpu_custom_call.1} parent=1 // pred_check_branch
      %1254 = sbr.rel (0) target = $region41
    $region40: #{tpu_custom_call.1} parent=1 // pred_region
      %s1256 = ssub.s32 256, 256
      %1257 = vsyncadd [#allocation5], %s1256
      %s1258 = sshll.u32 [#allocation4], 4
      %s1259 = int_to_ptr.vmem [resolvable:$true] %s1258
      %1264 = dma.vmem_to_hbm [thread:$0]  %s1259, 256, %s9, [#allocation5], 128, 128, 8
    $region41: #{tpu_custom_call.1} parent=1 // pred_fallthru
      _
    // Predicated region
    $region42: #{tpu_custom_call.1} parent=1 // pred_check
      _
    $region43: #{tpu_custom_call.1} parent=1 // pred_check_branch
      %1266 = sbr.rel (0) target = $region45
    $region44: #{tpu_custom_call.1} parent=1 // pred_region
      %1267 = dma.done [#allocation3], 256
    $region45: #{tpu_custom_call.1} parent=1 // pred_fallthru
      _
    // Predicated region
    $region46: #{tpu_custom_call.1} parent=1 // pred_check
      _
    $region47: #{tpu_custom_call.1} parent=1 // pred_check_branch
      %1269 = sbr.rel (0) target = $region49
    $region48: #{tpu_custom_call.1} parent=1 // pred_region
      %1270 = dma.done [#allocation5], 256
    $region49: #{tpu_custom_call.1} parent=1 // pred_fallthru
      _
    %1271 = vsyncpa [#allocation3], 1
    %1272 = vsyncpa [#allocation5], 1

</llo_original>
